<compile_context>
chip_gen: v6e
topology: v6e:2x2x1
jax: 0.10.0
libtpu: 0.0.40
codegen_flags: <defaults>
</compile_context>

<pallas_src>
import functools

import jax
import jax.numpy as jnp
from jax.experimental import pallas as pl
from jax.experimental.pallas import tpu as pltpu

_TM = 256     # node-row tile (MXU-friendly on v5e/v6e/v7x, tiny VMEM footprint)
_TK = 256     # A_hat reduction (column) tile
_LANE = 128


def _round_up(x, m):
    return (x + m - 1) // m * m


def _feat_kernel(feat_ref, w_in_ref, b_in_ref, w_g1_ref, x1_ref):
    """X1 = LeakyReLU(feat @ W_in + b_in) @ W_g1   (per node-row tile)."""
    neg = jnp.float32(0.01)  # nn.LeakyReLU default slope
    x = jnp.dot(feat_ref[...], w_in_ref[...], preferred_element_type=jnp.float32)
    x = x + b_in_ref[...]
    x = jnp.where(x > 0, x, neg * x)
    x1_ref[...] = jnp.dot(x.astype(jnp.bfloat16), w_g1_ref[...],
                          preferred_element_type=jnp.float32).astype(x1_ref.dtype)


def _spmm_fused_kernel(a_ref, x_ref, b_pre_ref, w_ref, b_post_ref, o_ref, acc_ref):
    """O = ((A_hat @ X) + b_pre) @ W + b_post, tiled over (row tile i, reduce k)."""
    k = pl.program_id(1)

    @pl.when(k == 0)
    def _():
        acc_ref[...] = jnp.zeros_like(acc_ref)

    # bf16 x bf16 -> f32 accumulate on the MXU.
    acc_ref[...] += jnp.dot(a_ref[...], x_ref[...],
                            preferred_element_type=jnp.float32)

    @pl.when(k == pl.num_programs(1) - 1)
    def _():
        # Bias adds + the small dense transform only once per row tile.
        y = acc_ref[...] + b_pre_ref[...]
        o = jnp.dot(y.astype(jnp.bfloat16), w_ref[...],
                    preferred_element_type=jnp.float32) + b_post_ref[...]
        o_ref[...] = o.astype(o_ref.dtype)


@functools.partial(jax.jit, static_argnames=("num_nodes",))
def gcn_forward(feature, edge_index, edge_type, params, *, num_nodes):
    """Dense-adjacency GCN forward. feature: [N, E], edge_index: [2, M] int32."""
    del edge_type  # unused by the reference forward (GCNConv ignores it)
    n = num_nodes
    (w_in, b_in, w_g1, b_g1, w_g2, b_g2, w_out, b_out) = params
    emb_dim, hid = w_in.shape
    out_dim = w_out.shape[1]

    n_pad = _round_up(n, max(_TM, _TK))
    e_pad = _round_up(emb_dim, _LANE)
    o_pad = _round_up(out_dim, _LANE)       # lane-dense output slab

    # ---- glue (plain JAX): normalized adjacency A_hat (PyG gcn_norm) ----
    src = edge_index[0]
    dst = edge_index[1]
    adj = jnp.zeros((n, n), jnp.float32).at[dst, src].add(1.0)
    adj = adj + jnp.eye(n, dtype=jnp.float32)          # add_self_loops
    deg = jnp.sum(adj, axis=1)
    dinv = jnp.where(deg > 0, jax.lax.rsqrt(deg), 0.0)
    a_hat = adj * dinv[:, None] * dinv[None, :]
    a_hat = jnp.pad(a_hat, ((0, n_pad - n), (0, n_pad - n))).astype(jnp.bfloat16)
    # TODO(synk): for genuinely sparse graphs, replace the dense A_hat with a
    # scalar-prefetch (PrefetchScalarGridSpec) gather SpMM: O(E*H) vs O(N^2*H).

    feat = jnp.pad(feature.astype(jnp.float32),
                   ((0, n_pad - n), (0, e_pad - emb_dim))).astype(jnp.bfloat16)

    w_in_p = jnp.pad(w_in, ((0, e_pad - emb_dim), (0, 0))).astype(jnp.bfloat16)
    w_g1_b = w_g1.astype(jnp.bfloat16)
    w_g2_b = w_g2.astype(jnp.bfloat16)
    w_out_p = jnp.pad(w_out, ((0, 0), (0, o_pad - out_dim))).astype(jnp.bfloat16)

    b_in_f = b_in.reshape(1, hid).astype(jnp.float32)
    b_g1_f = b_g1.reshape(1, hid).astype(jnp.float32)
    b_g2_f = b_g2.reshape(1, hid).astype(jnp.float32)
    b_out_p = jnp.pad(b_out.reshape(1, out_dim).astype(jnp.float32),
                      ((0, 0), (0, o_pad - out_dim)))
    zeros_h = jnp.zeros((1, hid), jnp.float32)

    n_i = n_pad // _TM
    n_k = n_pad // _TK

    # Stage 1: X1 = LeakyReLU(feat @ W_in + b_in) @ W_g1     -> [n_pad, H] bf16
    x1 = pl.pallas_call(
        _feat_kernel,
        out_shape=jax.ShapeDtypeStruct((n_pad, hid), jnp.bfloat16),
        grid=(n_i,),
        in_specs=[
            pl.BlockSpec((_TM, e_pad), lambda i: (i, 0)),
            pl.BlockSpec((e_pad, hid), lambda i: (0, 0)),
            pl.BlockSpec((1, hid), lambda i: (0, 0)),
            pl.BlockSpec((hid, hid), lambda i: (0, 0)),
        ],
        out_specs=pl.BlockSpec((_TM, hid), lambda i: (i, 0)),
        compiler_params=pltpu.CompilerParams(dimension_semantics=("parallel",)),
    )(feat, w_in_p, b_in_f, w_g1_b)

    def spmm(x, b_pre, w, b_post, out_dtype):
        hout = w.shape[1]
        return pl.pallas_call(
            _spmm_fused_kernel,
            out_shape=jax.ShapeDtypeStruct((n_pad, hout), out_dtype),
            grid=(n_i, n_k),
            in_specs=[
                pl.BlockSpec((_TM, _TK), lambda i, k: (i, k)),   # A_hat tile
                pl.BlockSpec((_TK, hid), lambda i, k: (k, 0)),   # X tile
                pl.BlockSpec((1, hid), lambda i, k: (0, 0)),     # pre-bias
                pl.BlockSpec((hid, hout), lambda i, k: (0, 0)),  # fused weight
                pl.BlockSpec((1, hout), lambda i, k: (0, 0)),    # post-bias
            ],
            out_specs=pl.BlockSpec((_TM, hout), lambda i, k: (i, 0)),
            scratch_shapes=[pltpu.VMEM((_TM, hid), jnp.float32)],
            compiler_params=pltpu.CompilerParams(
                dimension_semantics=("parallel", "arbitrary")),
        )(a_hat, x, b_pre, w, b_post)

    # Stage 2: gcn1 aggregation + (dropout=identity in eval) + gcn2 transform:
    #   Z = (A_hat @ X1 + b_g1) @ W_g2                      -> [n_pad, H] bf16
    # TODO(synk): training-mode dropout (pltpu.prng_random_bits mask) not emitted.
    z = spmm(x1, b_g1_f, w_g2_b, zeros_h, jnp.bfloat16)

    # Stage 3: gcn2 aggregation + output linear (lane-dense padded to 128):
    #   OUT = (A_hat @ Z + b_g2) @ W_out_pad + b_out_pad    -> [n_pad, 128] f32
    out_pad = spmm(z, b_g2_f, w_out_p, b_out_p, jnp.float32)

    return out_pad[:n, :out_dim]


def init_params(key, embedding_dimension=16, hidden_dimension=128, out_dim=3):
    """Deterministic synthetic parameters (shapes per the module's __init__)."""
    ks = jax.random.split(key, 8)

    def lin(kw, fan_in, fan_out):
        scale = 1.0 / jnp.sqrt(jnp.float32(fan_in))
        return jax.random.uniform(kw, (fan_in, fan_out), jnp.float32, -scale, scale)

    w_in = lin(ks[0], embedding_dimension, hidden_dimension)
    b_in = jax.random.uniform(ks[1], (1, hidden_dimension), jnp.float32, -0.1, 0.1)
    w_g1 = lin(ks[2], hidden_dimension, hidden_dimension)
    b_g1 = jax.random.uniform(ks[3], (1, hidden_dimension), jnp.float32, -0.1, 0.1)
    w_g2 = lin(ks[4], hidden_dimension, hidden_dimension)
    b_g2 = jax.random.uniform(ks[5], (1, hidden_dimension), jnp.float32, -0.1, 0.1)
    w_out = lin(ks[6], hidden_dimension, out_dim)
    b_out = jax.random.uniform(ks[7], (1, out_dim), jnp.float32, -0.1, 0.1)
    return (w_in, b_in, w_g1, b_g1, w_g2, b_g2, w_out, b_out)


if __name__ == "__main__":
    key = jax.random.PRNGKey(0)
    k_feat, k_edge, k_type, k_param = jax.random.split(key, 4)

    NUM_NODES = 8
    EMB_DIM = 16
    HIDDEN = 128
    OUT_DIM = 3
    NUM_EDGES = 16

    feature = jax.random.normal(k_feat, (NUM_NODES, EMB_DIM), jnp.float32)
    edge_index = jax.random.randint(k_edge, (2, NUM_EDGES), 0, NUM_NODES, jnp.int32)
    edge_type = jax.random.randint(k_type, (NUM_EDGES,), 0, 2, jnp.int32)  # unused
    params = init_params(k_param, EMB_DIM, HIDDEN, OUT_DIM)

    out = gcn_forward(feature, edge_index, edge_type, params, num_nodes=NUM_NODES)
    jax.block_until_ready(out)
    assert out.shape == (NUM_NODES, OUT_DIM)
    print("KERNEL_OK")
</pallas_src>

<mosaic_0001>
module attributes {stable_mosaic.version = 11 : i64} {
  func.func private @main(%arg0: i32) attributes {dimension_semantics = [#tpu.dimension_semantics<core_parallel>], iteration_bounds = array<i64: 2>, tpu.core_type = #tpu.core_type<sc_scalar_subcore>, window_params = []} {
    return
  }
}

module attributes {stable_mosaic.version = 11 : i64} {
  func.func private @main(%arg0: i32) attributes {dimension_semantics = [#tpu.dimension_semantics<core_parallel>], iteration_bounds = array<i64: 2>, tpu.core_type = #tpu.core_type<sc_scalar_subcore>, window_params = []} {
    return
  }
}

module attributes {stable_mosaic.version = 11 : i64} {
  func.func @_feat_kernel(%arg0: i32, %arg1: memref<256x128xbf16, #tpu.memory_space<vmem>>, %arg2: memref<128x128xbf16, #tpu.memory_space<vmem>>, %arg3: memref<1x128xf32, #tpu.memory_space<vmem>>, %arg4: memref<128x128xbf16, #tpu.memory_space<vmem>>, %arg5: memref<256x128xbf16, #tpu.memory_space<vmem>>) attributes {dimension_semantics = [#tpu.dimension_semantics<parallel>], iteration_bounds = array<i64: 1>, scalar_prefetch = 0 : i64, scratch_operands = 0 : i64, tpu.core_type = #tpu.core_type<tc>, window_params = [{transform_indices = @transform_0, window_bounds = array<i64: 256, 128>}, {pipeline_mode = #tpu.pipeline_mode<synchronous>, transform_indices = @transform_1, window_bounds = array<i64: 128, 128>}, {pipeline_mode = #tpu.pipeline_mode<synchronous>, transform_indices = @transform_2, window_bounds = array<i64: 1, 128>}, {pipeline_mode = #tpu.pipeline_mode<synchronous>, transform_indices = @transform_3, window_bounds = array<i64: 128, 128>}, {transform_indices = @transform_4, window_bounds = array<i64: 256, 128>}]} {
    %c0 = arith.constant 0 : index
    %c0_0 = arith.constant 0 : index
    %0 = vector.load %arg1[%c0, %c0_0] : memref<256x128xbf16, #tpu.memory_space<vmem>>, vector<256x128xbf16>
    %c0_1 = arith.constant 0 : index
    %c0_2 = arith.constant 0 : index
    %1 = vector.load %arg2[%c0_1, %c0_2] : memref<128x128xbf16, #tpu.memory_space<vmem>>, vector<128x128xbf16>
    %cst = arith.constant dense<0.000000e+00> : vector<256x128xf32>
    %2 = tpu.matmul %0, %1, %cst {dimension_numbers = #tpu.dot_dimension_numbers<[1], [0], [0], [1], [0, 0, 1, 1], [], []>} : vector<256x128xbf16>, vector<128x128xbf16>, vector<256x128xf32> -> vector<256x128xf32>
    %c0_3 = arith.constant 0 : index
    %c0_4 = arith.constant 0 : index
    %3 = vector.load %arg3[%c0_3, %c0_4] : memref<1x128xf32, #tpu.memory_space<vmem>>, vector<1x128xf32>
    %4 = vector.broadcast %3 : vector<1x128xf32> to vector<256x128xf32>
    %5 = arith.addf %2, %4 : vector<256x128xf32>
    %cst_5 = arith.constant 0.000000e+00 : f32
    %6 = vector.broadcast %cst_5 : f32 to vector<256x128xf32>
    %7 = arith.cmpf ogt, %5, %6 : vector<256x128xf32>
    %cst_6 = arith.constant 0.00999999977 : f32
    %8 = vector.broadcast %cst_6 : f32 to vector<256x128xf32>
    %9 = arith.mulf %8, %5 : vector<256x128xf32>
    %10 = arith.select %7, %5, %9 : vector<256x128xi1>, vector<256x128xf32>
    %11 = arith.truncf %10 : vector<256x128xf32> to vector<256x128xbf16>
    %c0_7 = arith.constant 0 : index
    %c0_8 = arith.constant 0 : index
    %12 = vector.load %arg4[%c0_7, %c0_8] : memref<128x128xbf16, #tpu.memory_space<vmem>>, vector<128x128xbf16>
    %cst_9 = arith.constant dense<0.000000e+00> : vector<256x128xf32>
    %13 = tpu.matmul %11, %12, %cst_9 {dimension_numbers = #tpu.dot_dimension_numbers<[1], [0], [0], [1], [0, 0, 1, 1], [], []>} : vector<256x128xbf16>, vector<128x128xbf16>, vector<256x128xf32> -> vector<256x128xf32>
    %14 = arith.truncf %13 : vector<256x128xf32> to vector<256x128xbf16>
    %c0_10 = arith.constant 0 : index
    %c0_11 = arith.constant 0 : index
    %15 = vector.load %arg5[%c0_10, %c0_11] : memref<256x128xbf16, #tpu.memory_space<vmem>>, vector<256x128xbf16>
    tpu.vector_store %arg5[%c0_10, %c0_11], %14 {strides = array<i32>} : memref<256x128xbf16, #tpu.memory_space<vmem>>, vector<256x128xbf16>,
    return
  }
  func.func @transform_0(%arg0: i32) -> (i32, i32) {
    %c0_i32 = arith.constant 0 : i32
    %c0_i32_0 = arith.constant 0 : i32
    return %arg0, %c0_i32 : i32, i32
  }
  func.func @transform_1(%arg0: i32) -> (i32, i32) {
    %c0_i32 = arith.constant 0 : i32
    %c0_i32_0 = arith.constant 0 : i32
    %c0_i32_1 = arith.constant 0 : i32
    return %c0_i32, %c0_i32_0 : i32, i32
  }
  func.func @transform_2(%arg0: i32) -> (i32, i32) {
    %c0_i32 = arith.constant 0 : i32
    %c0_i32_0 = arith.constant 0 : i32
    %c0_i32_1 = arith.constant 0 : i32
    return %c0_i32, %c0_i32_0 : i32, i32
  }
  func.func @transform_3(%arg0: i32) -> (i32, i32) {
    %c0_i32 = arith.constant 0 : i32
    %c0_i32_0 = arith.constant 0 : i32
    %c0_i32_1 = arith.constant 0 : i32
    return %c0_i32, %c0_i32_0 : i32, i32
  }
  func.func @transform_4(%arg0: i32) -> (i32, i32) {
    %c0_i32 = arith.constant 0 : i32
    %c0_i32_0 = arith.constant 0 : i32
    return %arg0, %c0_i32 : i32, i32
  }
}

module attributes {stable_mosaic.version = 11 : i64} {
  func.func @_spmm_fused_kernel(%arg0: i32, %arg1: i32, %arg2: memref<256x256xbf16, #tpu.memory_space<vmem>>, %arg3: memref<256x128xbf16, #tpu.memory_space<vmem>>, %arg4: memref<1x128xf32, #tpu.memory_space<vmem>>, %arg5: memref<128x128xbf16, #tpu.memory_space<vmem>>, %arg6: memref<1x128xf32, #tpu.memory_space<vmem>>, %arg7: memref<256x128xbf16, #tpu.memory_space<vmem>>, %arg8: memref<256x128xf32, #tpu.memory_space<vmem>>) attributes {dimension_semantics = [#tpu.dimension_semantics<parallel>, #tpu.dimension_semantics<arbitrary>], iteration_bounds = array<i64: 1, 1>, scalar_prefetch = 0 : i64, scratch_operands = 1 : i64, tpu.core_type = #tpu.core_type<tc>, window_params = [{transform_indices = @transform_0, window_bounds = array<i64: 256, 256>}, {transform_indices = @transform_1, window_bounds = array<i64: 256, 128>}, {pipeline_mode = #tpu.pipeline_mode<synchronous>, transform_indices = @transform_2, window_bounds = array<i64: 1, 128>}, {pipeline_mode = #tpu.pipeline_mode<synchronous>, transform_indices = @transform_3, window_bounds = array<i64: 128, 128>}, {pipeline_mode = #tpu.pipeline_mode<synchronous>, transform_indices = @transform_4, window_bounds = array<i64: 1, 128>}, {transform_indices = @transform_5, window_bounds = array<i64: 256, 128>}]} {
    %c0_i32 = arith.constant 0 : i32
    %0 = arith.cmpi eq, %arg1, %c0_i32 : i32
    %1 = arith.extui %0 : i1 to i32
    %c0_i32_0 = arith.constant 0 : i32
    %2 = arith.cmpi ne, %1, %c0_i32_0 : i32
    scf.if %2 {
      %cst_10 = arith.constant 0.000000e+00 : f32
      %12 = vector.broadcast %cst_10 : f32 to vector<256x128xf32>
      %c0_11 = arith.constant 0 : index
      %c0_12 = arith.constant 0 : index
      %13 = vector.load %arg8[%c0_11, %c0_12] : memref<256x128xf32, #tpu.memory_space<vmem>>, vector<256x128xf32>
      tpu.vector_store %arg8[%c0_11, %c0_12], %12 {strides = array<i32>} : memref<256x128xf32, #tpu.memory_space<vmem>>, vector<256x128xf32>,
    } else {
    }
    %c0 = arith.constant 0 : index
    %c0_1 = arith.constant 0 : index
    %3 = vector.load %arg8[%c0, %c0_1] : memref<256x128xf32, #tpu.memory_space<vmem>>, vector<256x128xf32>
    %c0_2 = arith.constant 0 : index
    %c0_3 = arith.constant 0 : index
    %4 = vector.load %arg2[%c0_2, %c0_3] : memref<256x256xbf16, #tpu.memory_space<vmem>>, vector<256x256xbf16>
    %c0_4 = arith.constant 0 : index
    %c0_5 = arith.constant 0 : index
    %5 = vector.load %arg3[%c0_4, %c0_5] : memref<256x128xbf16, #tpu.memory_space<vmem>>, vector<256x128xbf16>
    %cst = arith.constant dense<0.000000e+00> : vector<256x128xf32>
    %6 = tpu.matmul %4, %5, %cst {dimension_numbers = #tpu.dot_dimension_numbers<[1], [0], [0], [1], [0, 0, 1, 1], [], []>} : vector<256x256xbf16>, vector<256x128xbf16>, vector<256x128xf32> -> vector<256x128xf32>
    %7 = arith.addf %3, %6 : vector<256x128xf32>
    %c0_6 = arith.constant 0 : index
    %c0_7 = arith.constant 0 : index
    %8 = vector.load %arg8[%c0_6, %c0_7] : memref<256x128xf32, #tpu.memory_space<vmem>>, vector<256x128xf32>
    tpu.vector_store %arg8[%c0_6, %c0_7], %7 {strides = array<i32>} : memref<256x128xf32, #tpu.memory_space<vmem>>, vector<256x128xf32>,
    %c0_i32_8 = arith.constant 0 : i32
    %9 = arith.cmpi eq, %arg1, %c0_i32_8 : i32
    %10 = arith.extui %9 : i1 to i32
    %c0_i32_9 = arith.constant 0 : i32
    %11 = arith.cmpi ne, %10, %c0_i32_9 : i32
    scf.if %11 {
      %c0_10 = arith.constant 0 : index
      %c0_11 = arith.constant 0 : index
      %12 = vector.load %arg8[%c0_10, %c0_11] : memref<256x128xf32, #tpu.memory_space<vmem>>, vector<256x128xf32>
      %c0_12 = arith.constant 0 : index
      %c0_13 = arith.constant 0 : index
      %13 = vector.load %arg4[%c0_12, %c0_13] : memref<1x128xf32, #tpu.memory_space<vmem>>, vector<1x128xf32>
      %14 = vector.broadcast %13 : vector<1x128xf32> to vector<256x128xf32>
      %15 = arith.addf %12, %14 : vector<256x128xf32>
      %16 = arith.truncf %15 : vector<256x128xf32> to vector<256x128xbf16>
      %c0_14 = arith.constant 0 : index
      %c0_15 = arith.constant 0 : index
      %17 = vector.load %arg5[%c0_14, %c0_15] : memref<128x128xbf16, #tpu.memory_space<vmem>>, vector<128x128xbf16>
      %cst_16 = arith.constant dense<0.000000e+00> : vector<256x128xf32>
      %18 = tpu.matmul %16, %17, %cst_16 {dimension_numbers = #tpu.dot_dimension_numbers<[1], [0], [0], [1], [0, 0, 1, 1], [], []>} : vector<256x128xbf16>, vector<128x128xbf16>, vector<256x128xf32> -> vector<256x128xf32>
      %c0_17 = arith.constant 0 : index
      %c0_18 = arith.constant 0 : index
      %19 = vector.load %arg6[%c0_17, %c0_18] : memref<1x128xf32, #tpu.memory_space<vmem>>, vector<1x128xf32>
      %20 = vector.broadcast %19 : vector<1x128xf32> to vector<256x128xf32>
      %21 = arith.addf %18, %20 : vector<256x128xf32>
      %22 = arith.truncf %21 : vector<256x128xf32> to vector<256x128xbf16>
      %c0_19 = arith.constant 0 : index
      %c0_20 = arith.constant 0 : index
      %23 = vector.load %arg7[%c0_19, %c0_20] : memref<256x128xbf16, #tpu.memory_space<vmem>>, vector<256x128xbf16>
      tpu.vector_store %arg7[%c0_19, %c0_20], %22 {strides = array<i32>} : memref<256x128xbf16, #tpu.memory_space<vmem>>, vector<256x128xbf16>,
    } else {
    }
    return
  }
  func.func @transform_0(%arg0: i32, %arg1: i32) -> (i32, i32) {
    %c0_i32 = arith.constant 0 : i32
    return %arg0, %arg1 : i32, i32
  }
  func.func @transform_1(%arg0: i32, %arg1: i32) -> (i32, i32) {
    %c0_i32 = arith.constant 0 : i32
    %c0_i32_0 = arith.constant 0 : i32
    return %arg1, %c0_i32 : i32, i32
  }
  func.func @transform_2(%arg0: i32, %arg1: i32) -> (i32, i32) {
    %c0_i32 = arith.constant 0 : i32
    %c0_i32_0 = arith.constant 0 : i32
    %c0_i32_1 = arith.constant 0 : i32
    return %c0_i32, %c0_i32_0 : i32, i32
  }
  func.func @transform_3(%arg0: i32, %arg1: i32) -> (i32, i32) {
    %c0_i32 = arith.constant 0 : i32
    %c0_i32_0 = arith.constant 0 : i32
    %c0_i32_1 = arith.constant 0 : i32
    return %c0_i32, %c0_i32_0 : i32, i32
  }
  func.func @transform_4(%arg0: i32, %arg1: i32) -> (i32, i32) {
    %c0_i32 = arith.constant 0 : i32
    %c0_i32_0 = arith.constant 0 : i32
    %c0_i32_1 = arith.constant 0 : i32
    return %c0_i32, %c0_i32_0 : i32, i32
  }
  func.func @transform_5(%arg0: i32, %arg1: i32) -> (i32, i32) {
    %c0_i32 = arith.constant 0 : i32
    %c0_i32_0 = arith.constant 0 : i32
    return %arg0, %c0_i32 : i32, i32
  }
}

module attributes {stable_mosaic.version = 11 : i64} {
  func.func @_spmm_fused_kernel(%arg0: i32, %arg1: i32, %arg2: memref<256x256xbf16, #tpu.memory_space<vmem>>, %arg3: memref<256x128xbf16, #tpu.memory_space<vmem>>, %arg4: memref<1x128xf32, #tpu.memory_space<vmem>>, %arg5: memref<128x128xbf16, #tpu.memory_space<vmem>>, %arg6: memref<1x128xf32, #tpu.memory_space<vmem>>, %arg7: memref<256x128xf32, #tpu.memory_space<vmem>>, %arg8: memref<256x128xf32, #tpu.memory_space<vmem>>) attributes {dimension_semantics = [#tpu.dimension_semantics<parallel>, #tpu.dimension_semantics<arbitrary>], iteration_bounds = array<i64: 1, 1>, scalar_prefetch = 0 : i64, scratch_operands = 1 : i64, tpu.core_type = #tpu.core_type<tc>, window_params = [{transform_indices = @transform_0, window_bounds = array<i64: 256, 256>}, {transform_indices = @transform_1, window_bounds = array<i64: 256, 128>}, {pipeline_mode = #tpu.pipeline_mode<synchronous>, transform_indices = @transform_2, window_bounds = array<i64: 1, 128>}, {pipeline_mode = #tpu.pipeline_mode<synchronous>, transform_indices = @transform_3, window_bounds = array<i64: 128, 128>}, {pipeline_mode = #tpu.pipeline_mode<synchronous>, transform_indices = @transform_4, window_bounds = array<i64: 1, 128>}, {transform_indices = @transform_5, window_bounds = array<i64: 256, 128>}]} {
    %c0_i32 = arith.constant 0 : i32
    %0 = arith.cmpi eq, %arg1, %c0_i32 : i32
    %1 = arith.extui %0 : i1 to i32
    %c0_i32_0 = arith.constant 0 : i32
    %2 = arith.cmpi ne, %1, %c0_i32_0 : i32
    scf.if %2 {
      %cst_10 = arith.constant 0.000000e+00 : f32
      %12 = vector.broadcast %cst_10 : f32 to vector<256x128xf32>
      %c0_11 = arith.constant 0 : index
      %c0_12 = arith.constant 0 : index
      %13 = vector.load %arg8[%c0_11, %c0_12] : memref<256x128xf32, #tpu.memory_space<vmem>>, vector<256x128xf32>
      tpu.vector_store %arg8[%c0_11, %c0_12], %12 {strides = array<i32>} : memref<256x128xf32, #tpu.memory_space<vmem>>, vector<256x128xf32>,
    } else {
    }
    %c0 = arith.constant 0 : index
    %c0_1 = arith.constant 0 : index
    %3 = vector.load %arg8[%c0, %c0_1] : memref<256x128xf32, #tpu.memory_space<vmem>>, vector<256x128xf32>
    %c0_2 = arith.constant 0 : index
    %c0_3 = arith.constant 0 : index
    %4 = vector.load %arg2[%c0_2, %c0_3] : memref<256x256xbf16, #tpu.memory_space<vmem>>, vector<256x256xbf16>
    %c0_4 = arith.constant 0 : index
    %c0_5 = arith.constant 0 : index
    %5 = vector.load %arg3[%c0_4, %c0_5] : memref<256x128xbf16, #tpu.memory_space<vmem>>, vector<256x128xbf16>
    %cst = arith.constant dense<0.000000e+00> : vector<256x128xf32>
    %6 = tpu.matmul %4, %5, %cst {dimension_numbers = #tpu.dot_dimension_numbers<[1], [0], [0], [1], [0, 0, 1, 1], [], []>} : vector<256x256xbf16>, vector<256x128xbf16>, vector<256x128xf32> -> vector<256x128xf32>
    %7 = arith.addf %3, %6 : vector<256x128xf32>
    %c0_6 = arith.constant 0 : index
    %c0_7 = arith.constant 0 : index
    %8 = vector.load %arg8[%c0_6, %c0_7] : memref<256x128xf32, #tpu.memory_space<vmem>>, vector<256x128xf32>
    tpu.vector_store %arg8[%c0_6, %c0_7], %7 {strides = array<i32>} : memref<256x128xf32, #tpu.memory_space<vmem>>, vector<256x128xf32>,
    %c0_i32_8 = arith.constant 0 : i32
    %9 = arith.cmpi eq, %arg1, %c0_i32_8 : i32
    %10 = arith.extui %9 : i1 to i32
    %c0_i32_9 = arith.constant 0 : i32
    %11 = arith.cmpi ne, %10, %c0_i32_9 : i32
    scf.if %11 {
      %c0_10 = arith.constant 0 : index
      %c0_11 = arith.constant 0 : index
      %12 = vector.load %arg8[%c0_10, %c0_11] : memref<256x128xf32, #tpu.memory_space<vmem>>, vector<256x128xf32>
      %c0_12 = arith.constant 0 : index
      %c0_13 = arith.constant 0 : index
      %13 = vector.load %arg4[%c0_12, %c0_13] : memref<1x128xf32, #tpu.memory_space<vmem>>, vector<1x128xf32>
      %14 = vector.broadcast %13 : vector<1x128xf32> to vector<256x128xf32>
      %15 = arith.addf %12, %14 : vector<256x128xf32>
      %16 = arith.truncf %15 : vector<256x128xf32> to vector<256x128xbf16>
      %c0_14 = arith.constant 0 : index
      %c0_15 = arith.constant 0 : index
      %17 = vector.load %arg5[%c0_14, %c0_15] : memref<128x128xbf16, #tpu.memory_space<vmem>>, vector<128x128xbf16>
      %cst_16 = arith.constant dense<0.000000e+00> : vector<256x128xf32>
      %18 = tpu.matmul %16, %17, %cst_16 {dimension_numbers = #tpu.dot_dimension_numbers<[1], [0], [0], [1], [0, 0, 1, 1], [], []>} : vector<256x128xbf16>, vector<128x128xbf16>, vector<256x128xf32> -> vector<256x128xf32>
      %c0_17 = arith.constant 0 : index
      %c0_18 = arith.constant 0 : index
      %19 = vector.load %arg6[%c0_17, %c0_18] : memref<1x128xf32, #tpu.memory_space<vmem>>, vector<1x128xf32>
      %20 = vector.broadcast %19 : vector<1x128xf32> to vector<256x128xf32>
      %21 = arith.addf %18, %20 : vector<256x128xf32>
      %c0_19 = arith.constant 0 : index
      %c0_20 = arith.constant 0 : index
      %22 = vector.load %arg7[%c0_19, %c0_20] : memref<256x128xf32, #tpu.memory_space<vmem>>, vector<256x128xf32>
      tpu.vector_store %arg7[%c0_19, %c0_20], %21 {strides = array<i32>} : memref<256x128xf32, #tpu.memory_space<vmem>>, vector<256x128xf32>,
    } else {
    }
    return
  }
  func.func @transform_0(%arg0: i32, %arg1: i32) -> (i32, i32) {
    %c0_i32 = arith.constant 0 : i32
    return %arg0, %arg1 : i32, i32
  }
  func.func @transform_1(%arg0: i32, %arg1: i32) -> (i32, i32) {
    %c0_i32 = arith.constant 0 : i32
    %c0_i32_0 = arith.constant 0 : i32
    return %arg1, %c0_i32 : i32, i32
  }
  func.func @transform_2(%arg0: i32, %arg1: i32) -> (i32, i32) {
    %c0_i32 = arith.constant 0 : i32
    %c0_i32_0 = arith.constant 0 : i32
    %c0_i32_1 = arith.constant 0 : i32
    return %c0_i32, %c0_i32_0 : i32, i32
  }
  func.func @transform_3(%arg0: i32, %arg1: i32) -> (i32, i32) {
    %c0_i32 = arith.constant 0 : i32
    %c0_i32_0 = arith.constant 0 : i32
    %c0_i32_1 = arith.constant 0 : i32
    return %c0_i32, %c0_i32_0 : i32, i32
  }
  func.func @transform_4(%arg0: i32, %arg1: i32) -> (i32, i32) {
    %c0_i32 = arith.constant 0 : i32
    %c0_i32_0 = arith.constant 0 : i32
    %c0_i32_1 = arith.constant 0 : i32
    return %c0_i32, %c0_i32_0 : i32, i32
  }
  func.func @transform_5(%arg0: i32, %arg1: i32) -> (i32, i32) {
    %c0_i32 = arith.constant 0 : i32
    %c0_i32_0 = arith.constant 0 : i32
    return %arg0, %c0_i32 : i32, i32
  }
}

</mosaic_0001>

<llo_original>
// kernel: gcn_forward.3
$region0: #{gcn_forward.3}
  #allocation0 [shape = 'u32[]', space=smem, size = 0x4, offset = 0x4, fixed_abs, tag = 'smem constant byte address 0x4 - core index']
  #allocation1 [shape = 'u32[144,128]{1,0:T(1,128)}', space=vmem, size = 0x12000, scoped, tag = 'internal scratch']
  %s0 = inlined_call_operand.vmem [shape: bf16[256,128], index: 0, kind: input, shape index: {}]
  %s1 = inlined_call_operand.vmem [shape: bf16[128,128], index: 1, kind: input, shape index: {}]
  %s2 = inlined_call_operand.vmem [shape: f32[1,128], index: 2, kind: input, shape index: {}]
  %s3 = inlined_call_operand.vmem [shape: bf16[128,128], index: 3, kind: input, shape index: {}]
  %s4 = inlined_call_operand.vmem [shape: bf16[256,128], index: 4, kind: output, shape index: {}]
  %s5 = sld [smem:[#allocation0]]
  $region26: #{gcn_forward.3} parent=0
    _
  %s7 = ssub.s32 1, %s5
  %s8 = scalar_select 0, %s7, %s5
  // Predicated region
  $region2: #{gcn_forward.3} parent=0 // pred_check
    _
  $region3: #{gcn_forward.3} parent=0 // pred_check_branch
    %10 = sbr.rel (0) target = $region5
  $region4: #{gcn_forward.3} parent=0 // pred_region
    _
  $region5: #{gcn_forward.3} parent=0 // pred_fallthru
    _
  // Predicated region
  $region6: #{gcn_forward.3} parent=0 // pred_check
    _
  $region7: #{gcn_forward.3} parent=0 // pred_check_branch
    %12 = sbr.rel (0) target = $region9
  $region8: #{gcn_forward.3} parent=0 // pred_region
    _
  $region9: #{gcn_forward.3} parent=0 // pred_fallthru
    _
  // Predicated region
  $region10: #{gcn_forward.3} parent=0 // pred_check
    _
  $region11: #{gcn_forward.3} parent=0 // pred_check_branch
    %14 = sbr.rel (0) target = $region13
  $region12: #{gcn_forward.3} parent=0 // pred_region
    _
  $region13: #{gcn_forward.3} parent=0 // pred_fallthru
    _
  // Predicated region
  $region14: #{gcn_forward.3} parent=0 // pred_check
    _
  $region15: #{gcn_forward.3} parent=0 // pred_check_branch
    %16 = sbr.rel (0) target = $region17
  $region16: #{gcn_forward.3} parent=0 // pred_region
    _
  $region17: #{gcn_forward.3} parent=0 // pred_fallthru
    _
  %v18 = vld [vmem:[%s0] sm:$0xf]
  %v19 = vld [vmem:[%s0 + $0x4] sm:$0xf]
  %v20 = vld [vmem:[%s0 + $0x8] sm:$0xf]
  %v21 = vld [vmem:[%s0 + $0xc] sm:$0xf]
  %v22 = vld [vmem:[%s0 + $0x10] sm:$0xf]
  %v23 = vld [vmem:[%s0 + $0x14] sm:$0xf]
  %v24 = vld [vmem:[%s0 + $0x18] sm:$0xf]
  %v25 = vld [vmem:[%s0 + $0x1c] sm:$0xf]
  %v26 = vld [vmem:[%s0 + $0x20] sm:$0xf]
  %v27 = vld [vmem:[%s0 + $0x24] sm:$0xf]
  %v28 = vld [vmem:[%s0 + $0x28] sm:$0xf]
  %v29 = vld [vmem:[%s0 + $0x2c] sm:$0xf]
  %v30 = vld [vmem:[%s0 + $0x30] sm:$0xf]
  %v31 = vld [vmem:[%s0 + $0x34] sm:$0xf]
  %v32 = vld [vmem:[%s0 + $0x38] sm:$0xf]
  %v33 = vld [vmem:[%s0 + $0x3c] sm:$0xf]
  %v34 = vld [vmem:[%s0 + $0x40] sm:$0xf]
  %v35 = vld [vmem:[%s0 + $0x44] sm:$0xf]
  %v36 = vld [vmem:[%s0 + $0x48] sm:$0xf]
  %v37 = vld [vmem:[%s0 + $0x4c] sm:$0xf]
  %v38 = vld [vmem:[%s0 + $0x50] sm:$0xf]
  %v39 = vld [vmem:[%s0 + $0x54] sm:$0xf]
  %v40 = vld [vmem:[%s0 + $0x58] sm:$0xf]
  %v41 = vld [vmem:[%s0 + $0x5c] sm:$0xf]
  %v42 = vld [vmem:[%s0 + $0x60] sm:$0xf]
  %v43 = vld [vmem:[%s0 + $0x64] sm:$0xf]
  %v44 = vld [vmem:[%s0 + $0x68] sm:$0xf]
  %v45 = vld [vmem:[%s0 + $0x6c] sm:$0xf]
  %v46 = vld [vmem:[%s0 + $0x70] sm:$0xf]
  %v47 = vld [vmem:[%s0 + $0x74] sm:$0xf]
  %v48 = vld [vmem:[%s0 + $0x78] sm:$0xf]
  %v49 = vld [vmem:[%s0 + $0x7c] sm:$0xf]
  %v50 = vld [vmem:[%s1] sm:$0xf]
  %v51 = vld [vmem:[%s1 + $0x4] sm:$0xf]
  %v52 = vld [vmem:[%s1 + $0x8] sm:$0xf]
  %v53 = vld [vmem:[%s1 + $0xc] sm:$0xf]
  %v54 = vld [vmem:[%s1 + $0x10] sm:$0xf]
  %v55 = vld [vmem:[%s1 + $0x14] sm:$0xf]
  %v56 = vld [vmem:[%s1 + $0x18] sm:$0xf]
  %v57 = vld [vmem:[%s1 + $0x1c] sm:$0xf]
  %v58 = vld [vmem:[%s1 + $0x20] sm:$0xf]
  %v59 = vld [vmem:[%s1 + $0x24] sm:$0xf]
  %v60 = vld [vmem:[%s1 + $0x28] sm:$0xf]
  %v61 = vld [vmem:[%s1 + $0x2c] sm:$0xf]
  %v62 = vld [vmem:[%s1 + $0x30] sm:$0xf]
  %v63 = vld [vmem:[%s1 + $0x34] sm:$0xf]
  %v64 = vld [vmem:[%s1 + $0x38] sm:$0xf]
  %v65 = vld [vmem:[%s1 + $0x3c] sm:$0xf]
  %v66 = vld [vmem:[%s2] sm:$0x1]
  %v68 = vlaneseq
  %v69 = vshrl.u32 %v68, 7
  %v70 = vsub.s32 0, %v69
  %v71 = vrot.slane %v66, %v70
  %v105 = vunpack.c.l.b16 %v18
  %v106 = vunpack.c.l.b16 %v19
  %v107 = vunpack.c.l.b16 %v20
  %v108 = vunpack.c.l.b16 %v21
  %v109 = vunpack.c.l.b16 %v22
  %v110 = vunpack.c.l.b16 %v23
  %v111 = vunpack.c.l.b16 %v24
  %v112 = vunpack.c.l.b16 %v25
  %v113 = vunpack.c.l.b16 %v26
  %v114 = vunpack.c.l.b16 %v27
  %v115 = vunpack.c.l.b16 %v28
  %v116 = vunpack.c.l.b16 %v29
  %v117 = vunpack.c.l.b16 %v30
  %v118 = vunpack.c.l.b16 %v31
  %v119 = vunpack.c.l.b16 %v32
  %v120 = vunpack.c.l.b16 %v33
  %v121 = vunpack.c.l.b16 %v34
  %v122 = vunpack.c.l.b16 %v35
  %v123 = vunpack.c.l.b16 %v36
  %v124 = vunpack.c.l.b16 %v37
  %v125 = vunpack.c.l.b16 %v38
  %v126 = vunpack.c.l.b16 %v39
  %v127 = vunpack.c.l.b16 %v40
  %v128 = vunpack.c.l.b16 %v41
  %v129 = vunpack.c.l.b16 %v42
  %v130 = vunpack.c.l.b16 %v43
  %v131 = vunpack.c.l.b16 %v44
  %v132 = vunpack.c.l.b16 %v45
  %v133 = vunpack.c.l.b16 %v46
  %v134 = vunpack.c.l.b16 %v47
  %v135 = vunpack.c.l.b16 %v48
  %v136 = vunpack.c.l.b16 %v49
  %v137 = vpack.c.b16 %v106, %v105
  %v138 = vpack.c.b16 %v108, %v107
  %v139 = vpack.c.b16 %v110, %v109
  %v140 = vpack.c.b16 %v112, %v111
  %v141 = vpack.c.b16 %v114, %v113
  %v142 = vpack.c.b16 %v116, %v115
  %v143 = vpack.c.b16 %v118, %v117
  %v144 = vpack.c.b16 %v120, %v119
  %v145 = vpack.c.b16 %v122, %v121
  %v146 = vpack.c.b16 %v124, %v123
  %v147 = vpack.c.b16 %v126, %v125
  %v148 = vpack.c.b16 %v128, %v127
  %v149 = vpack.c.b16 %v130, %v129
  %v150 = vpack.c.b16 %v132, %v131
  %v151 = vpack.c.b16 %v134, %v133
  %v152 = vpack.c.b16 %v136, %v135
  %v185 = vunpack.c.l.b16 %v50
  %v186 = vunpack.c.l.b16 %v51
  %v187 = vunpack.c.l.b16 %v52
  %v188 = vunpack.c.l.b16 %v53
  %v189 = vunpack.c.l.b16 %v54
  %v190 = vunpack.c.l.b16 %v55
  %v191 = vunpack.c.l.b16 %v56
  %v192 = vunpack.c.l.b16 %v57
  %v193 = vunpack.c.l.b16 %v58
  %v194 = vunpack.c.l.b16 %v59
  %v195 = vunpack.c.l.b16 %v60
  %v196 = vunpack.c.l.b16 %v61
  %v197 = vunpack.c.l.b16 %v62
  %v198 = vunpack.c.l.b16 %v63
  %v199 = vunpack.c.l.b16 %v64
  %v200 = vunpack.c.l.b16 %v65
  %v201 = vpack.c.b16 %v186, %v185
  %v202 = vpack.c.b16 %v188, %v187
  %v203 = vpack.c.b16 %v190, %v189
  %v204 = vpack.c.b16 %v192, %v191
  %v205 = vpack.c.b16 %v194, %v193
  %v206 = vpack.c.b16 %v196, %v195
  %v207 = vpack.c.b16 %v198, %v197
  %v208 = vpack.c.b16 %v200, %v199
  %217 = vmatprep.subr.bf16.mxu0 0
  %218 = vmatpush1.bf16.msra.mxu0 %v208
  %219 = vmatprep.subr.bf16.mxu0 0
  %220 = vmatpush1.bf16.msra.mxu0 %v207
  %221 = vmatprep.subr.bf16.mxu0 0
  %222 = vmatpush1.bf16.msra.mxu0 %v206
  %223 = vmatprep.subr.bf16.mxu0 0
  %224 = vmatpush1.bf16.msra.mxu0 %v205
  %225 = vmatprep.subr.bf16.mxu0 0
  %226 = vmatpush1.bf16.msra.mxu0 %v204
  %227 = vmatprep.subr.bf16.mxu0 0
  %228 = vmatpush1.bf16.msra.mxu0 %v203
  %229 = vmatprep.subr.bf16.mxu0 0
  %230 = vmatpush1.bf16.msra.mxu0 %v202
  %231 = vmatprep.subr.bf16.mxu0 0
  %232 = vmatpush1.bf16.msra.mxu0 %v201
  %233 = vmatprep.subr.bf16.mxu0 0
  %234 = vmatpush2.bf16.msra.mxu0 0
  %235 = vmatprep.subr.bf16.mxu0 0
  %236 = vmatpush2.bf16.msra.mxu0 0
  %237 = vmatprep.subr.bf16.mxu0 0
  %238 = vmatpush2.bf16.msra.mxu0 0
  %239 = vmatprep.subr.bf16.mxu0 0
  %240 = vmatpush2.bf16.msra.mxu0 0
  %241 = vmatprep.subr.bf16.mxu0 0
  %242 = vmatpush2.bf16.msra.mxu0 0
  %243 = vmatprep.subr.bf16.mxu0 0
  %244 = vmatpush2.bf16.msra.mxu0 0
  %245 = vmatprep.subr.bf16.mxu0 0
  %246 = vmatpush2.bf16.msra.mxu0 0
  %247 = vmatprep.subr.bf16.mxu0 0
  %248 = vmatpush2.bf16.msra.mxu0 0
  %249 = vmatprep.mubr.bf16.mxu0 0
  %250 = vmatmul.mubr.bf16.gmra.mxu0 %v137
  %v251 = vpop.f32.mrf.mxu0
  %v252 = vadd.f32 %v71, %v251
  %v253 = vpop.f32.mrf.mxu0
  %v254 = vpop.f32.mrf.mxu0
  %v255 = vadd.f32 %v71, %v254
  %v256 = vpop.f32.mrf.mxu0
  %257 = vmatprep.mubr.bf16.mxu0 0
  %258 = vmatmul.mubr.bf16.gmra.mxu0 %v138
  %v259 = vpop.f32.mrf.mxu0
  %v260 = vadd.f32 %v71, %v259
  %v261 = vpop.f32.mrf.mxu0
  %v262 = vpop.f32.mrf.mxu0
  %v263 = vadd.f32 %v71, %v262
  %v264 = vpop.f32.mrf.mxu0
  %265 = vmatprep.mubr.bf16.mxu0 0
  %266 = vmatmul.mubr.bf16.gmra.mxu0 %v139
  %v267 = vpop.f32.mrf.mxu0
  %v268 = vadd.f32 %v71, %v267
  %v269 = vpop.f32.mrf.mxu0
  %v270 = vpop.f32.mrf.mxu0
  %v271 = vadd.f32 %v71, %v270
  %v272 = vpop.f32.mrf.mxu0
  %273 = vmatprep.mubr.bf16.mxu0 0
  %274 = vmatmul.mubr.bf16.gmra.mxu0 %v140
  %v275 = vpop.f32.mrf.mxu0
  %v276 = vadd.f32 %v71, %v275
  %v277 = vpop.f32.mrf.mxu0
  %v278 = vpop.f32.mrf.mxu0
  %v279 = vadd.f32 %v71, %v278
  %v280 = vpop.f32.mrf.mxu0
  %281 = vmatprep.mubr.bf16.mxu0 0
  %282 = vmatmul.mubr.bf16.gmra.mxu0 %v141
  %v283 = vpop.f32.mrf.mxu0
  %v284 = vadd.f32 %v71, %v283
  %v285 = vpop.f32.mrf.mxu0
  %v286 = vpop.f32.mrf.mxu0
  %v287 = vadd.f32 %v71, %v286
  %v288 = vpop.f32.mrf.mxu0
  %289 = vmatprep.mubr.bf16.mxu0 0
  %290 = vmatmul.mubr.bf16.gmra.mxu0 %v142
  %v291 = vpop.f32.mrf.mxu0
  %v292 = vadd.f32 %v71, %v291
  %v293 = vpop.f32.mrf.mxu0
  %v294 = vpop.f32.mrf.mxu0
  %v295 = vadd.f32 %v71, %v294
  %v296 = vpop.f32.mrf.mxu0
  %297 = vmatprep.mubr.bf16.mxu0 0
  %298 = vmatmul.mubr.bf16.gmra.mxu0 %v143
  %v299 = vpop.f32.mrf.mxu0
  %v300 = vadd.f32 %v71, %v299
  %v301 = vpop.f32.mrf.mxu0
  %v302 = vpop.f32.mrf.mxu0
  %v303 = vadd.f32 %v71, %v302
  %v304 = vpop.f32.mrf.mxu0
  %305 = vmatprep.mubr.bf16.mxu0 0
  %306 = vmatmul.mubr.bf16.gmra.mxu0 %v144
  %v307 = vpop.f32.mrf.mxu0
  %v308 = vadd.f32 %v71, %v307
  %v309 = vpop.f32.mrf.mxu0
  %v310 = vpop.f32.mrf.mxu0
  %v311 = vadd.f32 %v71, %v310
  %v312 = vpop.f32.mrf.mxu0
  %313 = vmatprep.mubr.bf16.mxu0 0
  %314 = vmatmul.mubr.bf16.gmra.mxu0 %v145
  %v315 = vpop.f32.mrf.mxu0
  %v316 = vadd.f32 %v71, %v315
  %v317 = vpop.f32.mrf.mxu0
  %v318 = vpop.f32.mrf.mxu0
  %v319 = vadd.f32 %v71, %v318
  %v320 = vpop.f32.mrf.mxu0
  %321 = vmatprep.mubr.bf16.mxu0 0
  %322 = vmatmul.mubr.bf16.gmra.mxu0 %v146
  %v323 = vpop.f32.mrf.mxu0
  %v324 = vadd.f32 %v71, %v323
  %v325 = vpop.f32.mrf.mxu0
  %v326 = vpop.f32.mrf.mxu0
  %v327 = vadd.f32 %v71, %v326
  %v328 = vpop.f32.mrf.mxu0
  %329 = vmatprep.mubr.bf16.mxu0 0
  %330 = vmatmul.mubr.bf16.gmra.mxu0 %v147
  %v331 = vpop.f32.mrf.mxu0
  %v332 = vadd.f32 %v71, %v331
  %v333 = vpop.f32.mrf.mxu0
  %v334 = vpop.f32.mrf.mxu0
  %v335 = vadd.f32 %v71, %v334
  %v336 = vpop.f32.mrf.mxu0
  %337 = vmatprep.mubr.bf16.mxu0 0
  %338 = vmatmul.mubr.bf16.gmra.mxu0 %v148
  %v339 = vpop.f32.mrf.mxu0
  %v340 = vadd.f32 %v71, %v339
  %v341 = vpop.f32.mrf.mxu0
  %v342 = vpop.f32.mrf.mxu0
  %v343 = vadd.f32 %v71, %v342
  %v344 = vpop.f32.mrf.mxu0
  %345 = vmatprep.mubr.bf16.mxu0 0
  %346 = vmatmul.mubr.bf16.gmra.mxu0 %v149
  %v347 = vpop.f32.mrf.mxu0
  %v348 = vadd.f32 %v71, %v347
  %v349 = vpop.f32.mrf.mxu0
  %v350 = vpop.f32.mrf.mxu0
  %v351 = vadd.f32 %v71, %v350
  %v352 = vpop.f32.mrf.mxu0
  %353 = vmatprep.mubr.bf16.mxu0 0
  %354 = vmatmul.mubr.bf16.gmra.mxu0 %v150
  %v355 = vpop.f32.mrf.mxu0
  %v356 = vadd.f32 %v71, %v355
  %v357 = vpop.f32.mrf.mxu0
  %v358 = vpop.f32.mrf.mxu0
  %v359 = vadd.f32 %v71, %v358
  %v360 = vpop.f32.mrf.mxu0
  %361 = vmatprep.mubr.bf16.mxu0 0
  %362 = vmatmul.mubr.bf16.gmra.mxu0 %v151
  %v363 = vpop.f32.mrf.mxu0
  %v364 = vadd.f32 %v71, %v363
  %v365 = vpop.f32.mrf.mxu0
  %v366 = vpop.f32.mrf.mxu0
  %v367 = vadd.f32 %v71, %v366
  %v368 = vpop.f32.mrf.mxu0
  %369 = vmatprep.mubr.bf16.mxu0 0
  %370 = vmatmul.mubr.bf16.gmra.mxu0 %v152
  %v371 = vpop.f32.mrf.mxu0
  %v372 = vadd.f32 %v71, %v371
  %v373 = vpop.f32.mrf.mxu0
  %v374 = vpop.f32.mrf.mxu0
  %v375 = vadd.f32 %v71, %v374
  %v376 = vpop.f32.mrf.mxu0
  %377 = vdwg.mxu0
  %vm378 = vcmp.gt.f32.partialorder %v252, 0.0
  %vm379 = vcmp.gt.f32.partialorder %v255, 0.0
  %vm380 = vcmp.gt.f32.partialorder %v260, 0.0
  %vm381 = vcmp.gt.f32.partialorder %v263, 0.0
  %vm382 = vcmp.gt.f32.partialorder %v268, 0.0
  %vm383 = vcmp.gt.f32.partialorder %v271, 0.0
  %vm384 = vcmp.gt.f32.partialorder %v276, 0.0
  %vm385 = vcmp.gt.f32.partialorder %v279, 0.0
  %vm386 = vcmp.gt.f32.partialorder %v284, 0.0
  %vm387 = vcmp.gt.f32.partialorder %v287, 0.0
  %vm388 = vcmp.gt.f32.partialorder %v292, 0.0
  %vm389 = vcmp.gt.f32.partialorder %v295, 0.0
  %vm390 = vcmp.gt.f32.partialorder %v300, 0.0
  %vm391 = vcmp.gt.f32.partialorder %v303, 0.0
  %vm392 = vcmp.gt.f32.partialorder %v308, 0.0
  %vm393 = vcmp.gt.f32.partialorder %v311, 0.0
  %vm394 = vcmp.gt.f32.partialorder %v316, 0.0
  %vm395 = vcmp.gt.f32.partialorder %v319, 0.0
  %vm396 = vcmp.gt.f32.partialorder %v324, 0.0
  %vm397 = vcmp.gt.f32.partialorder %v327, 0.0
  %vm398 = vcmp.gt.f32.partialorder %v332, 0.0
  %vm399 = vcmp.gt.f32.partialorder %v335, 0.0
  %vm400 = vcmp.gt.f32.partialorder %v340, 0.0
  %vm401 = vcmp.gt.f32.partialorder %v343, 0.0
  %vm402 = vcmp.gt.f32.partialorder %v348, 0.0
  %vm403 = vcmp.gt.f32.partialorder %v351, 0.0
  %vm404 = vcmp.gt.f32.partialorder %v356, 0.0
  %vm405 = vcmp.gt.f32.partialorder %v359, 0.0
  %vm406 = vcmp.gt.f32.partialorder %v364, 0.0
  %vm407 = vcmp.gt.f32.partialorder %v367, 0.0
  %vm408 = vcmp.gt.f32.partialorder %v372, 0.0
  %vm409 = vcmp.gt.f32.partialorder %v375, 0.0
  %v410 = vmul.f32 %v252, 0.01
  %v411 = vmul.f32 %v255, 0.01
  %v412 = vmul.f32 %v260, 0.01
  %v413 = vmul.f32 %v263, 0.01
  %v414 = vmul.f32 %v268, 0.01
  %v415 = vmul.f32 %v271, 0.01
  %v416 = vmul.f32 %v276, 0.01
  %v417 = vmul.f32 %v279, 0.01
  %v418 = vmul.f32 %v284, 0.01
  %v419 = vmul.f32 %v287, 0.01
  %v420 = vmul.f32 %v292, 0.01
  %v421 = vmul.f32 %v295, 0.01
  %v422 = vmul.f32 %v300, 0.01
  %v423 = vmul.f32 %v303, 0.01
  %v424 = vmul.f32 %v308, 0.01
  %v425 = vmul.f32 %v311, 0.01
  %v426 = vmul.f32 %v316, 0.01
  %v427 = vmul.f32 %v319, 0.01
  %v428 = vmul.f32 %v324, 0.01
  %v429 = vmul.f32 %v327, 0.01
  %v430 = vmul.f32 %v332, 0.01
  %v431 = vmul.f32 %v335, 0.01
  %v432 = vmul.f32 %v340, 0.01
  %v433 = vmul.f32 %v343, 0.01
  %v434 = vmul.f32 %v348, 0.01
  %v435 = vmul.f32 %v351, 0.01
  %v436 = vmul.f32 %v356, 0.01
  %v437 = vmul.f32 %v359, 0.01
  %v438 = vmul.f32 %v364, 0.01
  %v439 = vmul.f32 %v367, 0.01
  %v440 = vmul.f32 %v372, 0.01
  %v441 = vmul.f32 %v375, 0.01
  %v442 = vsel %vm378, %v252, %v410
  %v443 = vsel %vm379, %v255, %v411
  %v444 = vsel %vm380, %v260, %v412
  %v445 = vsel %vm381, %v263, %v413
  %v446 = vsel %vm382, %v268, %v414
  %v447 = vsel %vm383, %v271, %v415
  %v448 = vsel %vm384, %v276, %v416
  %v449 = vsel %vm385, %v279, %v417
  %v450 = vsel %vm386, %v284, %v418
  %v451 = vsel %vm387, %v287, %v419
  %v452 = vsel %vm388, %v292, %v420
  %v453 = vsel %vm389, %v295, %v421
  %v454 = vsel %vm390, %v300, %v422
  %v455 = vsel %vm391, %v303, %v423
  %v456 = vsel %vm392, %v308, %v424
  %v457 = vsel %vm393, %v311, %v425
  %v458 = vsel %vm394, %v316, %v426
  %v459 = vsel %vm395, %v319, %v427
  %v460 = vsel %vm396, %v324, %v428
  %v461 = vsel %vm397, %v327, %v429
  %v462 = vsel %vm398, %v332, %v430
  %v463 = vsel %vm399, %v335, %v431
  %v464 = vsel %vm400, %v340, %v432
  %v465 = vsel %vm401, %v343, %v433
  %v466 = vsel %vm402, %v348, %v434
  %v467 = vsel %vm403, %v351, %v435
  %v468 = vsel %vm404, %v356, %v436
  %v469 = vsel %vm405, %v359, %v437
  %v470 = vsel %vm406, %v364, %v438
  %v471 = vsel %vm407, %v367, %v439
  %v472 = vsel %vm408, %v372, %v440
  %v473 = vsel %vm409, %v375, %v441
  %v474 = vpack.c.bf16 %v443, %v442
  %v475 = vpack.c.bf16 %v445, %v444
  %v476 = vpack.c.bf16 %v447, %v446
  %v477 = vpack.c.bf16 %v449, %v448
  %v478 = vpack.c.bf16 %v451, %v450
  %v479 = vpack.c.bf16 %v453, %v452
  %v480 = vpack.c.bf16 %v455, %v454
  %v481 = vpack.c.bf16 %v457, %v456
  %v482 = vpack.c.bf16 %v459, %v458
  %v483 = vpack.c.bf16 %v461, %v460
  %v484 = vpack.c.bf16 %v463, %v462
  %v485 = vpack.c.bf16 %v465, %v464
  %v486 = vpack.c.bf16 %v467, %v466
  %v487 = vpack.c.bf16 %v469, %v468
  %v488 = vpack.c.bf16 %v471, %v470
  %v489 = vpack.c.bf16 %v473, %v472
  %v490 = vld [vmem:[%s3] sm:$0xf]
  %v491 = vld [vmem:[%s3 + $0x4] sm:$0xf]
  %v492 = vld [vmem:[%s3 + $0x8] sm:$0xf]
  %v493 = vld [vmem:[%s3 + $0xc] sm:$0xf]
  %v494 = vld [vmem:[%s3 + $0x10] sm:$0xf]
  %v495 = vld [vmem:[%s3 + $0x14] sm:$0xf]
  %v496 = vld [vmem:[%s3 + $0x18] sm:$0xf]
  %v497 = vld [vmem:[%s3 + $0x1c] sm:$0xf]
  %v498 = vld [vmem:[%s3 + $0x20] sm:$0xf]
  %v499 = vld [vmem:[%s3 + $0x24] sm:$0xf]
  %v500 = vld [vmem:[%s3 + $0x28] sm:$0xf]
  %v501 = vld [vmem:[%s3 + $0x2c] sm:$0xf]
  %v502 = vld [vmem:[%s3 + $0x30] sm:$0xf]
  %v503 = vld [vmem:[%s3 + $0x34] sm:$0xf]
  %v504 = vld [vmem:[%s3 + $0x38] sm:$0xf]
  %v505 = vld [vmem:[%s3 + $0x3c] sm:$0xf]
  %v522 = vunpack.c.l.b16 %v490
  %v523 = vunpack.c.l.b16 %v491
  %v524 = vunpack.c.l.b16 %v492
  %v525 = vunpack.c.l.b16 %v493
  %v526 = vunpack.c.l.b16 %v494
  %v527 = vunpack.c.l.b16 %v495
  %v528 = vunpack.c.l.b16 %v496
  %v529 = vunpack.c.l.b16 %v497
  %v530 = vunpack.c.l.b16 %v498
  %v531 = vunpack.c.l.b16 %v499
  %v532 = vunpack.c.l.b16 %v500
  %v533 = vunpack.c.l.b16 %v501
  %v534 = vunpack.c.l.b16 %v502
  %v535 = vunpack.c.l.b16 %v503
  %v536 = vunpack.c.l.b16 %v504
  %v537 = vunpack.c.l.b16 %v505
  %v538 = vpack.c.b16 %v523, %v522
  %v539 = vpack.c.b16 %v525, %v524
  %v540 = vpack.c.b16 %v527, %v526
  %v541 = vpack.c.b16 %v529, %v528
  %v542 = vpack.c.b16 %v531, %v530
  %v543 = vpack.c.b16 %v533, %v532
  %v544 = vpack.c.b16 %v535, %v534
  %v545 = vpack.c.b16 %v537, %v536
  %554 = vmatprep.subr.bf16.mxu0 0
  %555 = vmatpush1.bf16.msra.mxu0 %v545
  %556 = vmatprep.subr.bf16.mxu0 0
  %557 = vmatpush1.bf16.msra.mxu0 %v544
  %558 = vmatprep.subr.bf16.mxu0 0
  %559 = vmatpush1.bf16.msra.mxu0 %v543
  %560 = vmatprep.subr.bf16.mxu0 0
  %561 = vmatpush1.bf16.msra.mxu0 %v542
  %562 = vmatprep.subr.bf16.mxu0 0
  %563 = vmatpush1.bf16.msra.mxu0 %v541
  %564 = vmatprep.subr.bf16.mxu0 0
  %565 = vmatpush1.bf16.msra.mxu0 %v540
  %566 = vmatprep.subr.bf16.mxu0 0
  %567 = vmatpush1.bf16.msra.mxu0 %v539
  %568 = vmatprep.subr.bf16.mxu0 0
  %569 = vmatpush1.bf16.msra.mxu0 %v538
  %570 = vmatprep.subr.bf16.mxu0 0
  %571 = vmatpush2.bf16.msra.mxu0 0
  %572 = vmatprep.subr.bf16.mxu0 0
  %573 = vmatpush2.bf16.msra.mxu0 0
  %574 = vmatprep.subr.bf16.mxu0 0
  %575 = vmatpush2.bf16.msra.mxu0 0
  %576 = vmatprep.subr.bf16.mxu0 0
  %577 = vmatpush2.bf16.msra.mxu0 0
  %578 = vmatprep.subr.bf16.mxu0 0
  %579 = vmatpush2.bf16.msra.mxu0 0
  %580 = vmatprep.subr.bf16.mxu0 0
  %581 = vmatpush2.bf16.msra.mxu0 0
  %582 = vmatprep.subr.bf16.mxu0 0
  %583 = vmatpush2.bf16.msra.mxu0 0
  %584 = vmatprep.subr.bf16.mxu0 0
  %585 = vmatpush2.bf16.msra.mxu0 0
  %586 = vmatprep.mubr.bf16.mxu0 0
  %587 = vmatmul.mubr.bf16.gmra.mxu0 %v474
  %v588 = vpop.f32.mrf.mxu0
  %v589 = vadd.f32 0.0, %v588
  %v590 = vpop.f32.mrf.mxu0
  %v591 = vpop.f32.mrf.mxu0
  %v592 = vadd.f32 0.0, %v591
  %v593 = vpop.f32.mrf.mxu0
  %594 = vmatprep.mubr.bf16.mxu0 0
  %595 = vmatmul.mubr.bf16.gmra.mxu0 %v475
  %v596 = vpop.f32.mrf.mxu0
  %v597 = vadd.f32 0.0, %v596
  %v598 = vpop.f32.mrf.mxu0
  %v599 = vpop.f32.mrf.mxu0
  %v600 = vadd.f32 0.0, %v599
  %v601 = vpop.f32.mrf.mxu0
  %602 = vmatprep.mubr.bf16.mxu0 0
  %603 = vmatmul.mubr.bf16.gmra.mxu0 %v476
  %v604 = vpop.f32.mrf.mxu0
  %v605 = vadd.f32 0.0, %v604
  %v606 = vpop.f32.mrf.mxu0
  %v607 = vpop.f32.mrf.mxu0
  %v608 = vadd.f32 0.0, %v607
  %v609 = vpop.f32.mrf.mxu0
  %610 = vmatprep.mubr.bf16.mxu0 0
  %611 = vmatmul.mubr.bf16.gmra.mxu0 %v477
  %v612 = vpop.f32.mrf.mxu0
  %v613 = vadd.f32 0.0, %v612
  %v614 = vpop.f32.mrf.mxu0
  %v615 = vpop.f32.mrf.mxu0
  %v616 = vadd.f32 0.0, %v615
  %v617 = vpop.f32.mrf.mxu0
  %618 = vmatprep.mubr.bf16.mxu0 0
  %619 = vmatmul.mubr.bf16.gmra.mxu0 %v478
  %v620 = vpop.f32.mrf.mxu0
  %v621 = vadd.f32 0.0, %v620
  %v622 = vpop.f32.mrf.mxu0
  %v623 = vpop.f32.mrf.mxu0
  %v624 = vadd.f32 0.0, %v623
  %v625 = vpop.f32.mrf.mxu0
  %626 = vmatprep.mubr.bf16.mxu0 0
  %627 = vmatmul.mubr.bf16.gmra.mxu0 %v479
  %v628 = vpop.f32.mrf.mxu0
  %v629 = vadd.f32 0.0, %v628
  %v630 = vpop.f32.mrf.mxu0
  %v631 = vpop.f32.mrf.mxu0
  %v632 = vadd.f32 0.0, %v631
  %v633 = vpop.f32.mrf.mxu0
  %634 = vmatprep.mubr.bf16.mxu0 0
  %635 = vmatmul.mubr.bf16.gmra.mxu0 %v480
  %v636 = vpop.f32.mrf.mxu0
  %v637 = vadd.f32 0.0, %v636
  %v638 = vpop.f32.mrf.mxu0
  %v639 = vpop.f32.mrf.mxu0
  %v640 = vadd.f32 0.0, %v639
  %v641 = vpop.f32.mrf.mxu0
  %642 = vmatprep.mubr.bf16.mxu0 0
  %643 = vmatmul.mubr.bf16.gmra.mxu0 %v481
  %v644 = vpop.f32.mrf.mxu0
  %v645 = vadd.f32 0.0, %v644
  %v646 = vpop.f32.mrf.mxu0
  %v647 = vpop.f32.mrf.mxu0
  %v648 = vadd.f32 0.0, %v647
  %v649 = vpop.f32.mrf.mxu0
  %650 = vmatprep.mubr.bf16.mxu0 0
  %651 = vmatmul.mubr.bf16.gmra.mxu0 %v482
  %v652 = vpop.f32.mrf.mxu0
  %v653 = vadd.f32 0.0, %v652
  %v654 = vpop.f32.mrf.mxu0
  %v655 = vpop.f32.mrf.mxu0
  %v656 = vadd.f32 0.0, %v655
  %v657 = vpop.f32.mrf.mxu0
  %658 = vmatprep.mubr.bf16.mxu0 0
  %659 = vmatmul.mubr.bf16.gmra.mxu0 %v483
  %v660 = vpop.f32.mrf.mxu0
  %v661 = vadd.f32 0.0, %v660
  %v662 = vpop.f32.mrf.mxu0
  %v663 = vpop.f32.mrf.mxu0
  %v664 = vadd.f32 0.0, %v663
  %v665 = vpop.f32.mrf.mxu0
  %666 = vmatprep.mubr.bf16.mxu0 0
  %667 = vmatmul.mubr.bf16.gmra.mxu0 %v484
  %v668 = vpop.f32.mrf.mxu0
  %v669 = vadd.f32 0.0, %v668
  %v670 = vpop.f32.mrf.mxu0
  %v671 = vpop.f32.mrf.mxu0
  %v672 = vadd.f32 0.0, %v671
  %v673 = vpop.f32.mrf.mxu0
  %674 = vmatprep.mubr.bf16.mxu0 0
  %675 = vmatmul.mubr.bf16.gmra.mxu0 %v485
  %v676 = vpop.f32.mrf.mxu0
  %v677 = vadd.f32 0.0, %v676
  %v678 = vpop.f32.mrf.mxu0
  %v679 = vpop.f32.mrf.mxu0
  %v680 = vadd.f32 0.0, %v679
  %v681 = vpop.f32.mrf.mxu0
  %682 = vmatprep.mubr.bf16.mxu0 0
  %683 = vmatmul.mubr.bf16.gmra.mxu0 %v486
  %v684 = vpop.f32.mrf.mxu0
  %v685 = vadd.f32 0.0, %v684
  %v686 = vpop.f32.mrf.mxu0
  %v687 = vpop.f32.mrf.mxu0
  %v688 = vadd.f32 0.0, %v687
  %v689 = vpop.f32.mrf.mxu0
  %690 = vmatprep.mubr.bf16.mxu0 0
  %691 = vmatmul.mubr.bf16.gmra.mxu0 %v487
  %v692 = vpop.f32.mrf.mxu0
  %v693 = vadd.f32 0.0, %v692
  %v694 = vpop.f32.mrf.mxu0
  %v695 = vpop.f32.mrf.mxu0
  %v696 = vadd.f32 0.0, %v695
  %v697 = vpop.f32.mrf.mxu0
  %698 = vmatprep.mubr.bf16.mxu0 0
  %699 = vmatmul.mubr.bf16.gmra.mxu0 %v488
  %v700 = vpop.f32.mrf.mxu0
  %v701 = vadd.f32 0.0, %v700
  %v702 = vpop.f32.mrf.mxu0
  %v703 = vpop.f32.mrf.mxu0
  %v704 = vadd.f32 0.0, %v703
  %v705 = vpop.f32.mrf.mxu0
  %706 = vmatprep.mubr.bf16.mxu0 0
  %707 = vmatmul.mubr.bf16.gmra.mxu0 %v489
  %v708 = vpop.f32.mrf.mxu0
  %v709 = vadd.f32 0.0, %v708
  %v710 = vpop.f32.mrf.mxu0
  %v711 = vpop.f32.mrf.mxu0
  %v712 = vadd.f32 0.0, %v711
  %v713 = vpop.f32.mrf.mxu0
  %714 = vdwg.mxu0
  %v715 = vpack.c.bf16 %v592, %v589
  %v716 = vpack.c.bf16 %v600, %v597
  %v717 = vpack.c.bf16 %v608, %v605
  %v718 = vpack.c.bf16 %v616, %v613
  %v719 = vpack.c.bf16 %v624, %v621
  %v720 = vpack.c.bf16 %v632, %v629
  %v721 = vpack.c.bf16 %v640, %v637
  %v722 = vpack.c.bf16 %v648, %v645
  %v723 = vpack.c.bf16 %v656, %v653
  %v724 = vpack.c.bf16 %v664, %v661
  %v725 = vpack.c.bf16 %v672, %v669
  %v726 = vpack.c.bf16 %v680, %v677
  %v727 = vpack.c.bf16 %v688, %v685
  %v728 = vpack.c.bf16 %v696, %v693
  %v729 = vpack.c.bf16 %v704, %v701
  %v730 = vpack.c.bf16 %v712, %v709
  %v747 = vunpack.c.l.b16 %v715
  %v748 = vunpack.c.h.b16 %v715
  %v749 = vunpack.c.l.b16 %v716
  %v750 = vunpack.c.h.b16 %v716
  %v751 = vunpack.c.l.b16 %v717
  %v752 = vunpack.c.h.b16 %v717
  %v753 = vunpack.c.l.b16 %v718
  %v754 = vunpack.c.h.b16 %v718
  %v755 = vunpack.c.l.b16 %v719
  %v756 = vunpack.c.h.b16 %v719
  %v757 = vunpack.c.l.b16 %v720
  %v758 = vunpack.c.h.b16 %v720
  %v759 = vunpack.c.l.b16 %v721
  %v760 = vunpack.c.h.b16 %v721
  %v761 = vunpack.c.l.b16 %v722
  %v762 = vunpack.c.h.b16 %v722
  %v763 = vunpack.c.l.b16 %v723
  %v764 = vunpack.c.h.b16 %v723
  %v765 = vunpack.c.l.b16 %v724
  %v766 = vunpack.c.h.b16 %v724
  %v767 = vunpack.c.l.b16 %v725
  %v768 = vunpack.c.h.b16 %v725
  %v769 = vunpack.c.l.b16 %v726
  %v770 = vunpack.c.h.b16 %v726
  %v771 = vunpack.c.l.b16 %v727
  %v772 = vunpack.c.h.b16 %v727
  %v773 = vunpack.c.l.b16 %v728
  %v774 = vunpack.c.h.b16 %v728
  %v775 = vunpack.c.l.b16 %v729
  %v776 = vunpack.c.h.b16 %v729
  %v777 = vunpack.c.l.b16 %v730
  %v778 = vunpack.c.h.b16 %v730
  %v779 = vpack.c.b16 %v747, %v747
  %v780 = vpack.c.b16 %v748, %v748
  %v781 = vpack.c.b16 %v749, %v749
  %v782 = vpack.c.b16 %v750, %v750
  %v783 = vpack.c.b16 %v751, %v751
  %v784 = vpack.c.b16 %v752, %v752
  %v785 = vpack.c.b16 %v753, %v753
  %v786 = vpack.c.b16 %v754, %v754
  %v787 = vpack.c.b16 %v755, %v755
  %v788 = vpack.c.b16 %v756, %v756
  %v789 = vpack.c.b16 %v757, %v757
  %v790 = vpack.c.b16 %v758, %v758
  %v791 = vpack.c.b16 %v759, %v759
  %v792 = vpack.c.b16 %v760, %v760
  %v793 = vpack.c.b16 %v761, %v761
  %v794 = vpack.c.b16 %v762, %v762
  %v795 = vpack.c.b16 %v763, %v763
  %v796 = vpack.c.b16 %v764, %v764
  %v797 = vpack.c.b16 %v765, %v765
  %v798 = vpack.c.b16 %v766, %v766
  %v799 = vpack.c.b16 %v767, %v767
  %v800 = vpack.c.b16 %v768, %v768
  %v801 = vpack.c.b16 %v769, %v769
  %v802 = vpack.c.b16 %v770, %v770
  %v803 = vpack.c.b16 %v771, %v771
  %v804 = vpack.c.b16 %v772, %v772
  %v805 = vpack.c.b16 %v773, %v773
  %v806 = vpack.c.b16 %v774, %v774
  %v807 = vpack.c.b16 %v775, %v775
  %v808 = vpack.c.b16 %v776, %v776
  %v809 = vpack.c.b16 %v777, %v777
  %v810 = vpack.c.b16 %v778, %v778
  %843 = vst [vmem:[%s4] sm:$0xf] %v779
  %844 = vst [vmem:[%s4 + $0x4] sm:$0xf] %v780
  %845 = vst [vmem:[%s4 + $0x8] sm:$0xf] %v781
  %846 = vst [vmem:[%s4 + $0xc] sm:$0xf] %v782
  %847 = vst [vmem:[%s4 + $0x10] sm:$0xf] %v783
  %848 = vst [vmem:[%s4 + $0x14] sm:$0xf] %v784
  %849 = vst [vmem:[%s4 + $0x18] sm:$0xf] %v785
  %850 = vst [vmem:[%s4 + $0x1c] sm:$0xf] %v786
  %851 = vst [vmem:[%s4 + $0x20] sm:$0xf] %v787
  %852 = vst [vmem:[%s4 + $0x24] sm:$0xf] %v788
  %853 = vst [vmem:[%s4 + $0x28] sm:$0xf] %v789
  %854 = vst [vmem:[%s4 + $0x2c] sm:$0xf] %v790
  %855 = vst [vmem:[%s4 + $0x30] sm:$0xf] %v791
  %856 = vst [vmem:[%s4 + $0x34] sm:$0xf] %v792
  %857 = vst [vmem:[%s4 + $0x38] sm:$0xf] %v793
  %858 = vst [vmem:[%s4 + $0x3c] sm:$0xf] %v794
  %859 = vst [vmem:[%s4 + $0x40] sm:$0xf] %v795
  %860 = vst [vmem:[%s4 + $0x44] sm:$0xf] %v796
  %861 = vst [vmem:[%s4 + $0x48] sm:$0xf] %v797
  %862 = vst [vmem:[%s4 + $0x4c] sm:$0xf] %v798
  %863 = vst [vmem:[%s4 + $0x50] sm:$0xf] %v799
  %864 = vst [vmem:[%s4 + $0x54] sm:$0xf] %v800
  %865 = vst [vmem:[%s4 + $0x58] sm:$0xf] %v801
  %866 = vst [vmem:[%s4 + $0x5c] sm:$0xf] %v802
  %867 = vst [vmem:[%s4 + $0x60] sm:$0xf] %v803
  %868 = vst [vmem:[%s4 + $0x64] sm:$0xf] %v804
  %869 = vst [vmem:[%s4 + $0x68] sm:$0xf] %v805
  %870 = vst [vmem:[%s4 + $0x6c] sm:$0xf] %v806
  %871 = vst [vmem:[%s4 + $0x70] sm:$0xf] %v807
  %872 = vst [vmem:[%s4 + $0x74] sm:$0xf] %v808
  %873 = vst [vmem:[%s4 + $0x78] sm:$0xf] %v809
  %874 = vst [vmem:[%s4 + $0x7c] sm:$0xf] %v810
  // Predicated region
  $region18: #{gcn_forward.3} parent=0 // pred_check
    _
  $region19: #{gcn_forward.3} parent=0 // pred_check_branch
    %876 = sbr.rel (0) target = $region21
  $region20: #{gcn_forward.3} parent=0 // pred_region
    _
  $region21: #{gcn_forward.3} parent=0 // pred_fallthru
    _
  // Predicated region
  $region22: #{gcn_forward.3} parent=0 // pred_check
    _
  $region23: #{gcn_forward.3} parent=0 // pred_check_branch
    %878 = sbr.rel (0) target = $region25
  $region24: #{gcn_forward.3} parent=0 // pred_region
    _
  $region25: #{gcn_forward.3} parent=0 // pred_fallthru
    _

// kernel: gcn_forward.5
$region0: #{gcn_forward.5}
  #allocation0 [shape = 'u32[]', space=smem, size = 0x4, offset = 0x4, fixed_abs, tag = 'smem constant byte address 0x4 - core index']
  #allocation1 [shape = 'u32[144,128]{1,0:T(1,128)}', space=vmem, size = 0x12000, scoped, tag = 'internal scratch']
  #allocation2 [shape = 'f32[256,128]{1,0:T(8,128)}', space=vmem, size = 0x20000, scoped, tag = 'scratch operand']
  %s0 = inlined_call_operand.vmem [shape: bf16[256,256], index: 0, kind: input, shape index: {}]
  %s1 = inlined_call_operand.vmem [shape: bf16[256,128], index: 1, kind: input, shape index: {}]
  %s2 = inlined_call_operand.vmem [shape: f32[1,128], index: 2, kind: input, shape index: {}]
  %s3 = inlined_call_operand.vmem [shape: bf16[128,128], index: 3, kind: input, shape index: {}]
  %s4 = inlined_call_operand.vmem [shape: f32[1,128], index: 4, kind: input, shape index: {}]
  %s5 = inlined_call_operand.vmem [shape: f32[256,128], index: 5, kind: output, shape index: {}]
  %s6 = sld [smem:[#allocation0]]
  $region38: #{gcn_forward.5} parent=0
    _
  %s8 = ssub.s32 1, %s6
  %s9 = scalar_select 0, %s8, %s6
  // Predicated region
  $region2: #{gcn_forward.5} parent=0 // pred_check
    _
  $region3: #{gcn_forward.5} parent=0 // pred_check_branch
    %11 = sbr.rel (0) target = $region5
  $region4: #{gcn_forward.5} parent=0 // pred_region
    _
  $region5: #{gcn_forward.5} parent=0 // pred_fallthru
    _
  // Predicated region
  $region6: #{gcn_forward.5} parent=0 // pred_check
    _
  $region7: #{gcn_forward.5} parent=0 // pred_check_branch
    %13 = sbr.rel (0) target = $region9
  $region8: #{gcn_forward.5} parent=0 // pred_region
    _
  $region9: #{gcn_forward.5} parent=0 // pred_fallthru
    _
  // Predicated region
  $region10: #{gcn_forward.5} parent=0 // pred_check
    _
  $region11: #{gcn_forward.5} parent=0 // pred_check_branch
    %15 = sbr.rel (0) target = $region13
  $region12: #{gcn_forward.5} parent=0 // pred_region
    _
  $region13: #{gcn_forward.5} parent=0 // pred_fallthru
    _
  // Predicated region
  $region14: #{gcn_forward.5} parent=0 // pred_check
    _
  $region15: #{gcn_forward.5} parent=0 // pred_check_branch
    %17 = sbr.rel (0) target = $region17
  $region16: #{gcn_forward.5} parent=0 // pred_region
    _
  $region17: #{gcn_forward.5} parent=0 // pred_fallthru
    _
  // Predicated region
  $region18: #{gcn_forward.5} parent=0 // pred_check
    _
  $region19: #{gcn_forward.5} parent=0 // pred_check_branch
    %19 = sbr.rel (0) target = $region21
  $region20: #{gcn_forward.5} parent=0 // pred_region
    _
  $region21: #{gcn_forward.5} parent=0 // pred_fallthru
    _
  %p21 = scmp.eq.s32.totalorder 0, 0
  // Predicated region
  $region22: #{gcn_forward.5} parent=0 // pred_check
    %p22 = pneg %p21
  $region23: #{gcn_forward.5} parent=0 // pred_check_branch
    %24 = sbr.rel (%p22) target = $region25
  $region24: #{gcn_forward.5} parent=0 // pred_region
    %25 = vst [vmem:[#allocation2] sm:$0xff] 0.0
    %26 = vst [vmem:[#allocation2 + $0x8] sm:$0xff] 0.0
    %27 = vst [vmem:[#allocation2 + $0x10] sm:$0xff] 0.0
    %28 = vst [vmem:[#allocation2 + $0x18] sm:$0xff] 0.0
    %29 = vst [vmem:[#allocation2 + $0x20] sm:$0xff] 0.0
    %30 = vst [vmem:[#allocation2 + $0x28] sm:$0xff] 0.0
    %31 = vst [vmem:[#allocation2 + $0x30] sm:$0xff] 0.0
    %32 = vst [vmem:[#allocation2 + $0x38] sm:$0xff] 0.0
    %33 = vst [vmem:[#allocation2 + $0x40] sm:$0xff] 0.0
    %34 = vst [vmem:[#allocation2 + $0x48] sm:$0xff] 0.0
    %35 = vst [vmem:[#allocation2 + $0x50] sm:$0xff] 0.0
    %36 = vst [vmem:[#allocation2 + $0x58] sm:$0xff] 0.0
    %37 = vst [vmem:[#allocation2 + $0x60] sm:$0xff] 0.0
    %38 = vst [vmem:[#allocation2 + $0x68] sm:$0xff] 0.0
    %39 = vst [vmem:[#allocation2 + $0x70] sm:$0xff] 0.0
    %40 = vst [vmem:[#allocation2 + $0x78] sm:$0xff] 0.0
    %41 = vst [vmem:[#allocation2 + $0x80] sm:$0xff] 0.0
    %42 = vst [vmem:[#allocation2 + $0x88] sm:$0xff] 0.0
    %43 = vst [vmem:[#allocation2 + $0x90] sm:$0xff] 0.0
    %44 = vst [vmem:[#allocation2 + $0x98] sm:$0xff] 0.0
    %45 = vst [vmem:[#allocation2 + $0xa0] sm:$0xff] 0.0
    %46 = vst [vmem:[#allocation2 + $0xa8] sm:$0xff] 0.0
    %47 = vst [vmem:[#allocation2 + $0xb0] sm:$0xff] 0.0
    %48 = vst [vmem:[#allocation2 + $0xb8] sm:$0xff] 0.0
    %49 = vst [vmem:[#allocation2 + $0xc0] sm:$0xff] 0.0
    %50 = vst [vmem:[#allocation2 + $0xc8] sm:$0xff] 0.0
    %51 = vst [vmem:[#allocation2 + $0xd0] sm:$0xff] 0.0
    %52 = vst [vmem:[#allocation2 + $0xd8] sm:$0xff] 0.0
    %53 = vst [vmem:[#allocation2 + $0xe0] sm:$0xff] 0.0
    %54 = vst [vmem:[#allocation2 + $0xe8] sm:$0xff] 0.0
    %55 = vst [vmem:[#allocation2 + $0xf0] sm:$0xff] 0.0
    %56 = vst [vmem:[#allocation2 + $0xf8] sm:$0xff] 0.0
  $region25: #{gcn_forward.5} parent=0 // pred_fallthru
    _
  %v57 = vld [vmem:[#allocation2] sm:$0xff]
  %v58 = vld [vmem:[#allocation2 + $0x8] sm:$0xff]
  %v59 = vld [vmem:[#allocation2 + $0x10] sm:$0xff]
  %v60 = vld [vmem:[#allocation2 + $0x18] sm:$0xff]
  %v61 = vld [vmem:[#allocation2 + $0x20] sm:$0xff]
  %v62 = vld [vmem:[#allocation2 + $0x28] sm:$0xff]
  %v63 = vld [vmem:[#allocation2 + $0x30] sm:$0xff]
  %v64 = vld [vmem:[#allocation2 + $0x38] sm:$0xff]
  %v65 = vld [vmem:[#allocation2 + $0x40] sm:$0xff]
  %v66 = vld [vmem:[#allocation2 + $0x48] sm:$0xff]
  %v67 = vld [vmem:[#allocation2 + $0x50] sm:$0xff]
  %v68 = vld [vmem:[#allocation2 + $0x58] sm:$0xff]
  %v69 = vld [vmem:[#allocation2 + $0x60] sm:$0xff]
  %v70 = vld [vmem:[#allocation2 + $0x68] sm:$0xff]
  %v71 = vld [vmem:[#allocation2 + $0x70] sm:$0xff]
  %v72 = vld [vmem:[#allocation2 + $0x78] sm:$0xff]
  %v73 = vld [vmem:[#allocation2 + $0x80] sm:$0xff]
  %v74 = vld [vmem:[#allocation2 + $0x88] sm:$0xff]
  %v75 = vld [vmem:[#allocation2 + $0x90] sm:$0xff]
  %v76 = vld [vmem:[#allocation2 + $0x98] sm:$0xff]
  %v77 = vld [vmem:[#allocation2 + $0xa0] sm:$0xff]
  %v78 = vld [vmem:[#allocation2 + $0xa8] sm:$0xff]
  %v79 = vld [vmem:[#allocation2 + $0xb0] sm:$0xff]
  %v80 = vld [vmem:[#allocation2 + $0xb8] sm:$0xff]
  %v81 = vld [vmem:[#allocation2 + $0xc0] sm:$0xff]
  %v82 = vld [vmem:[#allocation2 + $0xc8] sm:$0xff]
  %v83 = vld [vmem:[#allocation2 + $0xd0] sm:$0xff]
  %v84 = vld [vmem:[#allocation2 + $0xd8] sm:$0xff]
  %v85 = vld [vmem:[#allocation2 + $0xe0] sm:$0xff]
  %v86 = vld [vmem:[#allocation2 + $0xe8] sm:$0xff]
  %v87 = vld [vmem:[#allocation2 + $0xf0] sm:$0xff]
  %v88 = vld [vmem:[#allocation2 + $0xf8] sm:$0xff]
  %v89 = vld [vmem:[%s0] sm:$0xff]
  %v90 = vld [vmem:[%s0 + $0x8] sm:$0xff]
  %v91 = vld [vmem:[%s0 + $0x10] sm:$0xff]
  %v92 = vld [vmem:[%s0 + $0x18] sm:$0xff]
  %v93 = vld [vmem:[%s0 + $0x20] sm:$0xff]
  %v94 = vld [vmem:[%s0 + $0x28] sm:$0xff]
  %v95 = vld [vmem:[%s0 + $0x30] sm:$0xff]
  %v96 = vld [vmem:[%s0 + $0x38] sm:$0xff]
  %v97 = vld [vmem:[%s0 + $0x40] sm:$0xff]
  %v98 = vld [vmem:[%s0 + $0x48] sm:$0xff]
  %v99 = vld [vmem:[%s0 + $0x50] sm:$0xff]
  %v100 = vld [vmem:[%s0 + $0x58] sm:$0xff]
  %v101 = vld [vmem:[%s0 + $0x60] sm:$0xff]
  %v102 = vld [vmem:[%s0 + $0x68] sm:$0xff]
  %v103 = vld [vmem:[%s0 + $0x70] sm:$0xff]
  %v104 = vld [vmem:[%s0 + $0x78] sm:$0xff]
  %v105 = vld [vmem:[%s0 + $0x80] sm:$0xff]
  %v106 = vld [vmem:[%s0 + $0x88] sm:$0xff]
  %v107 = vld [vmem:[%s0 + $0x90] sm:$0xff]
  %v108 = vld [vmem:[%s0 + $0x98] sm:$0xff]
  %v109 = vld [vmem:[%s0 + $0xa0] sm:$0xff]
  %v110 = vld [vmem:[%s0 + $0xa8] sm:$0xff]
  %v111 = vld [vmem:[%s0 + $0xb0] sm:$0xff]
  %v112 = vld [vmem:[%s0 + $0xb8] sm:$0xff]
  %v113 = vld [vmem:[%s0 + $0xc0] sm:$0xff]
  %v114 = vld [vmem:[%s0 + $0xc8] sm:$0xff]
  %v115 = vld [vmem:[%s0 + $0xd0] sm:$0xff]
  %v116 = vld [vmem:[%s0 + $0xd8] sm:$0xff]
  %v117 = vld [vmem:[%s0 + $0xe0] sm:$0xff]
  %v118 = vld [vmem:[%s0 + $0xe8] sm:$0xff]
  %v119 = vld [vmem:[%s0 + $0xf0] sm:$0xff]
  %v120 = vld [vmem:[%s0 + $0xf8] sm:$0xff]
  %v121 = vld [vmem:[%s1] sm:$0xf]
  %v122 = vld [vmem:[%s1 + $0x4] sm:$0xf]
  %v123 = vld [vmem:[%s1 + $0x8] sm:$0xf]
  %v124 = vld [vmem:[%s1 + $0xc] sm:$0xf]
  %v125 = vld [vmem:[%s1 + $0x10] sm:$0xf]
  %v126 = vld [vmem:[%s1 + $0x14] sm:$0xf]
  %v127 = vld [vmem:[%s1 + $0x18] sm:$0xf]
  %v128 = vld [vmem:[%s1 + $0x1c] sm:$0xf]
  %v129 = vld [vmem:[%s1 + $0x20] sm:$0xf]
  %v130 = vld [vmem:[%s1 + $0x24] sm:$0xf]
  %v131 = vld [vmem:[%s1 + $0x28] sm:$0xf]
  %v132 = vld [vmem:[%s1 + $0x2c] sm:$0xf]
  %v133 = vld [vmem:[%s1 + $0x30] sm:$0xf]
  %v134 = vld [vmem:[%s1 + $0x34] sm:$0xf]
  %v135 = vld [vmem:[%s1 + $0x38] sm:$0xf]
  %v136 = vld [vmem:[%s1 + $0x3c] sm:$0xf]
  %v137 = vld [vmem:[%s1 + $0x40] sm:$0xf]
  %v138 = vld [vmem:[%s1 + $0x44] sm:$0xf]
  %v139 = vld [vmem:[%s1 + $0x48] sm:$0xf]
  %v140 = vld [vmem:[%s1 + $0x4c] sm:$0xf]
  %v141 = vld [vmem:[%s1 + $0x50] sm:$0xf]
  %v142 = vld [vmem:[%s1 + $0x54] sm:$0xf]
  %v143 = vld [vmem:[%s1 + $0x58] sm:$0xf]
  %v144 = vld [vmem:[%s1 + $0x5c] sm:$0xf]
  %v145 = vld [vmem:[%s1 + $0x60] sm:$0xf]
  %v146 = vld [vmem:[%s1 + $0x64] sm:$0xf]
  %v147 = vld [vmem:[%s1 + $0x68] sm:$0xf]
  %v148 = vld [vmem:[%s1 + $0x6c] sm:$0xf]
  %v149 = vld [vmem:[%s1 + $0x70] sm:$0xf]
  %v150 = vld [vmem:[%s1 + $0x74] sm:$0xf]
  %v151 = vld [vmem:[%s1 + $0x78] sm:$0xf]
  %v152 = vld [vmem:[%s1 + $0x7c] sm:$0xf]
  %v185 = vunpack.c.l.b16 %v89
  %v186 = vunpack.c.h.b16 %v89
  %v187 = vunpack.c.l.b16 %v90
  %v188 = vunpack.c.h.b16 %v90
  %v189 = vunpack.c.l.b16 %v91
  %v190 = vunpack.c.h.b16 %v91
  %v191 = vunpack.c.l.b16 %v92
  %v192 = vunpack.c.h.b16 %v92
  %v193 = vunpack.c.l.b16 %v93
  %v194 = vunpack.c.h.b16 %v93
  %v195 = vunpack.c.l.b16 %v94
  %v196 = vunpack.c.h.b16 %v94
  %v197 = vunpack.c.l.b16 %v95
  %v198 = vunpack.c.h.b16 %v95
  %v199 = vunpack.c.l.b16 %v96
  %v200 = vunpack.c.h.b16 %v96
  %v201 = vunpack.c.l.b16 %v97
  %v202 = vunpack.c.h.b16 %v97
  %v203 = vunpack.c.l.b16 %v98
  %v204 = vunpack.c.h.b16 %v98
  %v205 = vunpack.c.l.b16 %v99
  %v206 = vunpack.c.h.b16 %v99
  %v207 = vunpack.c.l.b16 %v100
  %v208 = vunpack.c.h.b16 %v100
  %v209 = vunpack.c.l.b16 %v101
  %v210 = vunpack.c.h.b16 %v101
  %v211 = vunpack.c.l.b16 %v102
  %v212 = vunpack.c.h.b16 %v102
  %v213 = vunpack.c.l.b16 %v103
  %v214 = vunpack.c.h.b16 %v103
  %v215 = vunpack.c.l.b16 %v104
  %v216 = vunpack.c.h.b16 %v104
  %v217 = vunpack.c.l.b16 %v105
  %v218 = vunpack.c.h.b16 %v105
  %v219 = vunpack.c.l.b16 %v106
  %v220 = vunpack.c.h.b16 %v106
  %v221 = vunpack.c.l.b16 %v107
  %v222 = vunpack.c.h.b16 %v107
  %v223 = vunpack.c.l.b16 %v108
  %v224 = vunpack.c.h.b16 %v108
  %v225 = vunpack.c.l.b16 %v109
  %v226 = vunpack.c.h.b16 %v109
  %v227 = vunpack.c.l.b16 %v110
  %v228 = vunpack.c.h.b16 %v110
  %v229 = vunpack.c.l.b16 %v111
  %v230 = vunpack.c.h.b16 %v111
  %v231 = vunpack.c.l.b16 %v112
  %v232 = vunpack.c.h.b16 %v112
  %v233 = vunpack.c.l.b16 %v113
  %v234 = vunpack.c.h.b16 %v113
  %v235 = vunpack.c.l.b16 %v114
  %v236 = vunpack.c.h.b16 %v114
  %v237 = vunpack.c.l.b16 %v115
  %v238 = vunpack.c.h.b16 %v115
  %v239 = vunpack.c.l.b16 %v116
  %v240 = vunpack.c.h.b16 %v116
  %v241 = vunpack.c.l.b16 %v117
  %v242 = vunpack.c.h.b16 %v117
  %v243 = vunpack.c.l.b16 %v118
  %v244 = vunpack.c.h.b16 %v118
  %v245 = vunpack.c.l.b16 %v119
  %v246 = vunpack.c.h.b16 %v119
  %v247 = vunpack.c.l.b16 %v120
  %v248 = vunpack.c.h.b16 %v120
  %v249 = vpack.c.b16 %v187, %v185
  %v250 = vpack.c.b16 %v188, %v186
  %v251 = vpack.c.b16 %v191, %v189
  %v252 = vpack.c.b16 %v192, %v190
  %v253 = vpack.c.b16 %v195, %v193
  %v254 = vpack.c.b16 %v196, %v194
  %v255 = vpack.c.b16 %v199, %v197
  %v256 = vpack.c.b16 %v200, %v198
  %v257 = vpack.c.b16 %v203, %v201
  %v258 = vpack.c.b16 %v204, %v202
  %v259 = vpack.c.b16 %v207, %v205
  %v260 = vpack.c.b16 %v208, %v206
  %v261 = vpack.c.b16 %v211, %v209
  %v262 = vpack.c.b16 %v212, %v210
  %v263 = vpack.c.b16 %v215, %v213
  %v264 = vpack.c.b16 %v216, %v214
  %v265 = vpack.c.b16 %v219, %v217
  %v266 = vpack.c.b16 %v220, %v218
  %v267 = vpack.c.b16 %v223, %v221
  %v268 = vpack.c.b16 %v224, %v222
  %v269 = vpack.c.b16 %v227, %v225
  %v270 = vpack.c.b16 %v228, %v226
  %v271 = vpack.c.b16 %v231, %v229
  %v272 = vpack.c.b16 %v232, %v230
  %v273 = vpack.c.b16 %v235, %v233
  %v274 = vpack.c.b16 %v236, %v234
  %v275 = vpack.c.b16 %v239, %v237
  %v276 = vpack.c.b16 %v240, %v238
  %v277 = vpack.c.b16 %v243, %v241
  %v278 = vpack.c.b16 %v244, %v242
  %v279 = vpack.c.b16 %v247, %v245
  %v280 = vpack.c.b16 %v248, %v246
  %v345 = vunpack.c.l.b16 %v121
  %v346 = vunpack.c.l.b16 %v122
  %v347 = vunpack.c.l.b16 %v123
  %v348 = vunpack.c.l.b16 %v124
  %v349 = vunpack.c.l.b16 %v125
  %v350 = vunpack.c.l.b16 %v126
  %v351 = vunpack.c.l.b16 %v127
  %v352 = vunpack.c.l.b16 %v128
  %v353 = vunpack.c.l.b16 %v129
  %v354 = vunpack.c.l.b16 %v130
  %v355 = vunpack.c.l.b16 %v131
  %v356 = vunpack.c.l.b16 %v132
  %v357 = vunpack.c.l.b16 %v133
  %v358 = vunpack.c.l.b16 %v134
  %v359 = vunpack.c.l.b16 %v135
  %v360 = vunpack.c.l.b16 %v136
  %v361 = vunpack.c.l.b16 %v137
  %v362 = vunpack.c.l.b16 %v138
  %v363 = vunpack.c.l.b16 %v139
  %v364 = vunpack.c.l.b16 %v140
  %v365 = vunpack.c.l.b16 %v141
  %v366 = vunpack.c.l.b16 %v142
  %v367 = vunpack.c.l.b16 %v143
  %v368 = vunpack.c.l.b16 %v144
  %v369 = vunpack.c.l.b16 %v145
  %v370 = vunpack.c.l.b16 %v146
  %v371 = vunpack.c.l.b16 %v147
  %v372 = vunpack.c.l.b16 %v148
  %v373 = vunpack.c.l.b16 %v149
  %v374 = vunpack.c.l.b16 %v150
  %v375 = vunpack.c.l.b16 %v151
  %v376 = vunpack.c.l.b16 %v152
  %v377 = vpack.c.b16 %v346, %v345
  %v378 = vpack.c.b16 %v348, %v347
  %v379 = vpack.c.b16 %v350, %v349
  %v380 = vpack.c.b16 %v352, %v351
  %v381 = vpack.c.b16 %v354, %v353
  %v382 = vpack.c.b16 %v356, %v355
  %v383 = vpack.c.b16 %v358, %v357
  %v384 = vpack.c.b16 %v360, %v359
  %v385 = vpack.c.b16 %v362, %v361
  %v386 = vpack.c.b16 %v364, %v363
  %v387 = vpack.c.b16 %v366, %v365
  %v388 = vpack.c.b16 %v368, %v367
  %v389 = vpack.c.b16 %v370, %v369
  %v390 = vpack.c.b16 %v372, %v371
  %v391 = vpack.c.b16 %v374, %v373
  %v392 = vpack.c.b16 %v376, %v375
  %409 = vmatprep.subr.bf16.mxu0 0
  %410 = vmatpush1.bf16.msra.mxu0 %v384
  %411 = vmatprep.subr.bf16.mxu0 0
  %412 = vmatpush1.bf16.msra.mxu0 %v383
  %413 = vmatprep.subr.bf16.mxu0 0
  %414 = vmatpush1.bf16.msra.mxu0 %v382
  %415 = vmatprep.subr.bf16.mxu0 0
  %416 = vmatpush1.bf16.msra.mxu0 %v381
  %417 = vmatprep.subr.bf16.mxu0 0
  %418 = vmatpush1.bf16.msra.mxu0 %v380
  %419 = vmatprep.subr.bf16.mxu0 0
  %420 = vmatpush1.bf16.msra.mxu0 %v379
  %421 = vmatprep.subr.bf16.mxu0 0
  %422 = vmatpush1.bf16.msra.mxu0 %v378
  %423 = vmatprep.subr.bf16.mxu0 0
  %424 = vmatpush1.bf16.msra.mxu0 %v377
  %425 = vmatprep.subr.bf16.mxu0 0
  %426 = vmatpush2.bf16.msra.mxu0 %v392
  %427 = vmatprep.subr.bf16.mxu0 0
  %428 = vmatpush2.bf16.msra.mxu0 %v391
  %429 = vmatprep.subr.bf16.mxu0 0
  %430 = vmatpush2.bf16.msra.mxu0 %v390
  %431 = vmatprep.subr.bf16.mxu0 0
  %432 = vmatpush2.bf16.msra.mxu0 %v389
  %433 = vmatprep.subr.bf16.mxu0 0
  %434 = vmatpush2.bf16.msra.mxu0 %v388
  %435 = vmatprep.subr.bf16.mxu0 0
  %436 = vmatpush2.bf16.msra.mxu0 %v387
  %437 = vmatprep.subr.bf16.mxu0 0
  %438 = vmatpush2.bf16.msra.mxu0 %v386
  %439 = vmatprep.subr.bf16.mxu0 0
  %440 = vmatpush2.bf16.msra.mxu0 %v385
  %441 = vmatprep.mubr.bf16.mxu0 %v250
  %442 = vmatmul.mubr.bf16.gmra.mxu0 %v249
  %v443 = vpop.f32.mrf.mxu0
  %v444 = vadd.f32 0.0, %v443
  %v445 = vpop.f32.mrf.mxu0
  %v446 = vpop.f32.mrf.mxu0
  %v447 = vadd.f32 0.0, %v446
  %v448 = vpop.f32.mrf.mxu0
  %449 = vmatprep.mubr.bf16.mxu0 %v252
  %450 = vmatmul.mubr.bf16.gmra.mxu0 %v251
  %v451 = vpop.f32.mrf.mxu0
  %v452 = vadd.f32 0.0, %v451
  %v453 = vpop.f32.mrf.mxu0
  %v454 = vpop.f32.mrf.mxu0
  %v455 = vadd.f32 0.0, %v454
  %v456 = vpop.f32.mrf.mxu0
  %457 = vmatprep.mubr.bf16.mxu0 %v254
  %458 = vmatmul.mubr.bf16.gmra.mxu0 %v253
  %v459 = vpop.f32.mrf.mxu0
  %v460 = vadd.f32 0.0, %v459
  %v461 = vpop.f32.mrf.mxu0
  %v462 = vpop.f32.mrf.mxu0
  %v463 = vadd.f32 0.0, %v462
  %v464 = vpop.f32.mrf.mxu0
  %465 = vmatprep.mubr.bf16.mxu0 %v256
  %466 = vmatmul.mubr.bf16.gmra.mxu0 %v255
  %v467 = vpop.f32.mrf.mxu0
  %v468 = vadd.f32 0.0, %v467
  %v469 = vpop.f32.mrf.mxu0
  %v470 = vpop.f32.mrf.mxu0
  %v471 = vadd.f32 0.0, %v470
  %v472 = vpop.f32.mrf.mxu0
  %473 = vmatprep.mubr.bf16.mxu0 %v258
  %474 = vmatmul.mubr.bf16.gmra.mxu0 %v257
  %v475 = vpop.f32.mrf.mxu0
  %v476 = vadd.f32 0.0, %v475
  %v477 = vpop.f32.mrf.mxu0
  %v478 = vpop.f32.mrf.mxu0
  %v479 = vadd.f32 0.0, %v478
  %v480 = vpop.f32.mrf.mxu0
  %481 = vmatprep.mubr.bf16.mxu0 %v260
  %482 = vmatmul.mubr.bf16.gmra.mxu0 %v259
  %v483 = vpop.f32.mrf.mxu0
  %v484 = vadd.f32 0.0, %v483
  %v485 = vpop.f32.mrf.mxu0
  %v486 = vpop.f32.mrf.mxu0
  %v487 = vadd.f32 0.0, %v486
  %v488 = vpop.f32.mrf.mxu0
  %489 = vmatprep.mubr.bf16.mxu0 %v262
  %490 = vmatmul.mubr.bf16.gmra.mxu0 %v261
  %v491 = vpop.f32.mrf.mxu0
  %v492 = vadd.f32 0.0, %v491
  %v493 = vpop.f32.mrf.mxu0
  %v494 = vpop.f32.mrf.mxu0
  %v495 = vadd.f32 0.0, %v494
  %v496 = vpop.f32.mrf.mxu0
  %497 = vmatprep.mubr.bf16.mxu0 %v264
  %498 = vmatmul.mubr.bf16.gmra.mxu0 %v263
  %v499 = vpop.f32.mrf.mxu0
  %v500 = vadd.f32 0.0, %v499
  %v501 = vpop.f32.mrf.mxu0
  %v502 = vpop.f32.mrf.mxu0
  %v503 = vadd.f32 0.0, %v502
  %v504 = vpop.f32.mrf.mxu0
  %505 = vmatprep.mubr.bf16.mxu0 %v266
  %506 = vmatmul.mubr.bf16.gmra.mxu0 %v265
  %v507 = vpop.f32.mrf.mxu0
  %v508 = vadd.f32 0.0, %v507
  %v509 = vpop.f32.mrf.mxu0
  %v510 = vpop.f32.mrf.mxu0
  %v511 = vadd.f32 0.0, %v510
  %v512 = vpop.f32.mrf.mxu0
  %513 = vmatprep.mubr.bf16.mxu0 %v268
  %514 = vmatmul.mubr.bf16.gmra.mxu0 %v267
  %v515 = vpop.f32.mrf.mxu0
  %v516 = vadd.f32 0.0, %v515
  %v517 = vpop.f32.mrf.mxu0
  %v518 = vpop.f32.mrf.mxu0
  %v519 = vadd.f32 0.0, %v518
  %v520 = vpop.f32.mrf.mxu0
  %521 = vmatprep.mubr.bf16.mxu0 %v270
  %522 = vmatmul.mubr.bf16.gmra.mxu0 %v269
  %v523 = vpop.f32.mrf.mxu0
  %v524 = vadd.f32 0.0, %v523
  %v525 = vpop.f32.mrf.mxu0
  %v526 = vpop.f32.mrf.mxu0
  %v527 = vadd.f32 0.0, %v526
  %v528 = vpop.f32.mrf.mxu0
  %529 = vmatprep.mubr.bf16.mxu0 %v272
  %530 = vmatmul.mubr.bf16.gmra.mxu0 %v271
  %v531 = vpop.f32.mrf.mxu0
  %v532 = vadd.f32 0.0, %v531
  %v533 = vpop.f32.mrf.mxu0
  %v534 = vpop.f32.mrf.mxu0
  %v535 = vadd.f32 0.0, %v534
  %v536 = vpop.f32.mrf.mxu0
  %537 = vmatprep.mubr.bf16.mxu0 %v274
  %538 = vmatmul.mubr.bf16.gmra.mxu0 %v273
  %v539 = vpop.f32.mrf.mxu0
  %v540 = vadd.f32 0.0, %v539
  %v541 = vpop.f32.mrf.mxu0
  %v542 = vpop.f32.mrf.mxu0
  %v543 = vadd.f32 0.0, %v542
  %v544 = vpop.f32.mrf.mxu0
  %545 = vmatprep.mubr.bf16.mxu0 %v276
  %546 = vmatmul.mubr.bf16.gmra.mxu0 %v275
  %v547 = vpop.f32.mrf.mxu0
  %v548 = vadd.f32 0.0, %v547
  %v549 = vpop.f32.mrf.mxu0
  %v550 = vpop.f32.mrf.mxu0
  %v551 = vadd.f32 0.0, %v550
  %v552 = vpop.f32.mrf.mxu0
  %553 = vmatprep.mubr.bf16.mxu0 %v278
  %554 = vmatmul.mubr.bf16.gmra.mxu0 %v277
  %v555 = vpop.f32.mrf.mxu0
  %v556 = vadd.f32 0.0, %v555
  %v557 = vpop.f32.mrf.mxu0
  %v558 = vpop.f32.mrf.mxu0
  %v559 = vadd.f32 0.0, %v558
  %v560 = vpop.f32.mrf.mxu0
  %561 = vmatprep.mubr.bf16.mxu0 %v280
  %562 = vmatmul.mubr.bf16.gmra.mxu0 %v279
  %v563 = vpop.f32.mrf.mxu0
  %v564 = vadd.f32 0.0, %v563
  %v565 = vpop.f32.mrf.mxu0
  %v566 = vpop.f32.mrf.mxu0
  %v567 = vadd.f32 0.0, %v566
  %v568 = vpop.f32.mrf.mxu0
  %569 = vdwg.mxu0
  %v570 = vadd.f32 %v57, %v444
  %v571 = vadd.f32 %v58, %v447
  %v572 = vadd.f32 %v59, %v452
  %v573 = vadd.f32 %v60, %v455
  %v574 = vadd.f32 %v61, %v460
  %v575 = vadd.f32 %v62, %v463
  %v576 = vadd.f32 %v63, %v468
  %v577 = vadd.f32 %v64, %v471
  %v578 = vadd.f32 %v65, %v476
  %v579 = vadd.f32 %v66, %v479
  %v580 = vadd.f32 %v67, %v484
  %v581 = vadd.f32 %v68, %v487
  %v582 = vadd.f32 %v69, %v492
  %v583 = vadd.f32 %v70, %v495
  %v584 = vadd.f32 %v71, %v500
  %v585 = vadd.f32 %v72, %v503
  %v586 = vadd.f32 %v73, %v508
  %v587 = vadd.f32 %v74, %v511
  %v588 = vadd.f32 %v75, %v516
  %v589 = vadd.f32 %v76, %v519
  %v590 = vadd.f32 %v77, %v524
  %v591 = vadd.f32 %v78, %v527
  %v592 = vadd.f32 %v79, %v532
  %v593 = vadd.f32 %v80, %v535
  %v594 = vadd.f32 %v81, %v540
  %v595 = vadd.f32 %v82, %v543
  %v596 = vadd.f32 %v83, %v548
  %v597 = vadd.f32 %v84, %v551
  %v598 = vadd.f32 %v85, %v556
  %v599 = vadd.f32 %v86, %v559
  %v600 = vadd.f32 %v87, %v564
  %v601 = vadd.f32 %v88, %v567
  %602 = vst [vmem:[#allocation2] sm:$0xff] %v570
  %603 = vst [vmem:[#allocation2 + $0x8] sm:$0xff] %v571
  %604 = vst [vmem:[#allocation2 + $0x10] sm:$0xff] %v572
  %605 = vst [vmem:[#allocation2 + $0x18] sm:$0xff] %v573
  %606 = vst [vmem:[#allocation2 + $0x20] sm:$0xff] %v574
  %607 = vst [vmem:[#allocation2 + $0x28] sm:$0xff] %v575
  %608 = vst [vmem:[#allocation2 + $0x30] sm:$0xff] %v576
  %609 = vst [vmem:[#allocation2 + $0x38] sm:$0xff] %v577
  %610 = vst [vmem:[#allocation2 + $0x40] sm:$0xff] %v578
  %611 = vst [vmem:[#allocation2 + $0x48] sm:$0xff] %v579
  %612 = vst [vmem:[#allocation2 + $0x50] sm:$0xff] %v580
  %613 = vst [vmem:[#allocation2 + $0x58] sm:$0xff] %v581
  %614 = vst [vmem:[#allocation2 + $0x60] sm:$0xff] %v582
  %615 = vst [vmem:[#allocation2 + $0x68] sm:$0xff] %v583
  %616 = vst [vmem:[#allocation2 + $0x70] sm:$0xff] %v584
  %617 = vst [vmem:[#allocation2 + $0x78] sm:$0xff] %v585
  %618 = vst [vmem:[#allocation2 + $0x80] sm:$0xff] %v586
  %619 = vst [vmem:[#allocation2 + $0x88] sm:$0xff] %v587
  %620 = vst [vmem:[#allocation2 + $0x90] sm:$0xff] %v588
  %621 = vst [vmem:[#allocation2 + $0x98] sm:$0xff] %v589
  %622 = vst [vmem:[#allocation2 + $0xa0] sm:$0xff] %v590
  %623 = vst [vmem:[#allocation2 + $0xa8] sm:$0xff] %v591
  %624 = vst [vmem:[#allocation2 + $0xb0] sm:$0xff] %v592
  %625 = vst [vmem:[#allocation2 + $0xb8] sm:$0xff] %v593
  %626 = vst [vmem:[#allocation2 + $0xc0] sm:$0xff] %v594
  %627 = vst [vmem:[#allocation2 + $0xc8] sm:$0xff] %v595
  %628 = vst [vmem:[#allocation2 + $0xd0] sm:$0xff] %v596
  %629 = vst [vmem:[#allocation2 + $0xd8] sm:$0xff] %v597
  %630 = vst [vmem:[#allocation2 + $0xe0] sm:$0xff] %v598
  %631 = vst [vmem:[#allocation2 + $0xe8] sm:$0xff] %v599
  %632 = vst [vmem:[#allocation2 + $0xf0] sm:$0xff] %v600
  %633 = vst [vmem:[#allocation2 + $0xf8] sm:$0xff] %v601
  // Predicated region
  $region26: #{gcn_forward.5} parent=0 // pred_check
    %p634 = pneg %p21
  $region27: #{gcn_forward.5} parent=0 // pred_check_branch
    %636 = sbr.rel (%p634) target = $region29
  $region28: #{gcn_forward.5} parent=0 // pred_region
    %v637 = vld [vmem:[#allocation2] sm:$0xff]
    %v638 = vld [vmem:[#allocation2 + $0x8] sm:$0xff]
    %v639 = vld [vmem:[#allocation2 + $0x10] sm:$0xff]
    %v640 = vld [vmem:[#allocation2 + $0x18] sm:$0xff]
    %v641 = vld [vmem:[#allocation2 + $0x20] sm:$0xff]
    %v642 = vld [vmem:[#allocation2 + $0x28] sm:$0xff]
    %v643 = vld [vmem:[#allocation2 + $0x30] sm:$0xff]
    %v644 = vld [vmem:[#allocation2 + $0x38] sm:$0xff]
    %v645 = vld [vmem:[#allocation2 + $0x40] sm:$0xff]
    %v646 = vld [vmem:[#allocation2 + $0x48] sm:$0xff]
    %v647 = vld [vmem:[#allocation2 + $0x50] sm:$0xff]
    %v648 = vld [vmem:[#allocation2 + $0x58] sm:$0xff]
    %v649 = vld [vmem:[#allocation2 + $0x60] sm:$0xff]
    %v650 = vld [vmem:[#allocation2 + $0x68] sm:$0xff]
    %v651 = vld [vmem:[#allocation2 + $0x70] sm:$0xff]
    %v652 = vld [vmem:[#allocation2 + $0x78] sm:$0xff]
    %v653 = vld [vmem:[#allocation2 + $0x80] sm:$0xff]
    %v654 = vld [vmem:[#allocation2 + $0x88] sm:$0xff]
    %v655 = vld [vmem:[#allocation2 + $0x90] sm:$0xff]
    %v656 = vld [vmem:[#allocation2 + $0x98] sm:$0xff]
    %v657 = vld [vmem:[#allocation2 + $0xa0] sm:$0xff]
    %v658 = vld [vmem:[#allocation2 + $0xa8] sm:$0xff]
    %v659 = vld [vmem:[#allocation2 + $0xb0] sm:$0xff]
    %v660 = vld [vmem:[#allocation2 + $0xb8] sm:$0xff]
    %v661 = vld [vmem:[#allocation2 + $0xc0] sm:$0xff]
    %v662 = vld [vmem:[#allocation2 + $0xc8] sm:$0xff]
    %v663 = vld [vmem:[#allocation2 + $0xd0] sm:$0xff]
    %v664 = vld [vmem:[#allocation2 + $0xd8] sm:$0xff]
    %v665 = vld [vmem:[#allocation2 + $0xe0] sm:$0xff]
    %v666 = vld [vmem:[#allocation2 + $0xe8] sm:$0xff]
    %v667 = vld [vmem:[#allocation2 + $0xf0] sm:$0xff]
    %v668 = vld [vmem:[#allocation2 + $0xf8] sm:$0xff]
    %v669 = vld [vmem:[%s2] sm:$0x1]
    %v671 = vlaneseq
    %v672 = vshrl.u32 %v671, 7
    %v673 = vsub.s32 0, %v672
    %v674 = vrot.slane %v669, %v673
    %v676 = vadd.f32 %v637, %v674
    %v677 = vadd.f32 %v638, %v674
    %v678 = vadd.f32 %v639, %v674
    %v679 = vadd.f32 %v640, %v674
    %v680 = vadd.f32 %v641, %v674
    %v681 = vadd.f32 %v642, %v674
    %v682 = vadd.f32 %v643, %v674
    %v683 = vadd.f32 %v644, %v674
    %v684 = vadd.f32 %v645, %v674
    %v685 = vadd.f32 %v646, %v674
    %v686 = vadd.f32 %v647, %v674
    %v687 = vadd.f32 %v648, %v674
    %v688 = vadd.f32 %v649, %v674
    %v689 = vadd.f32 %v650, %v674
    %v690 = vadd.f32 %v651, %v674
    %v691 = vadd.f32 %v652, %v674
    %v692 = vadd.f32 %v653, %v674
    %v693 = vadd.f32 %v654, %v674
    %v694 = vadd.f32 %v655, %v674
    %v695 = vadd.f32 %v656, %v674
    %v696 = vadd.f32 %v657, %v674
    %v697 = vadd.f32 %v658, %v674
    %v698 = vadd.f32 %v659, %v674
    %v699 = vadd.f32 %v660, %v674
    %v700 = vadd.f32 %v661, %v674
    %v701 = vadd.f32 %v662, %v674
    %v702 = vadd.f32 %v663, %v674
    %v703 = vadd.f32 %v664, %v674
    %v704 = vadd.f32 %v665, %v674
    %v705 = vadd.f32 %v666, %v674
    %v706 = vadd.f32 %v667, %v674
    %v707 = vadd.f32 %v668, %v674
    %v708 = vpack.c.bf16 %v677, %v676
    %v709 = vpack.c.bf16 %v679, %v678
    %v710 = vpack.c.bf16 %v681, %v680
    %v711 = vpack.c.bf16 %v683, %v682
    %v712 = vpack.c.bf16 %v685, %v684
    %v713 = vpack.c.bf16 %v687, %v686
    %v714 = vpack.c.bf16 %v689, %v688
    %v715 = vpack.c.bf16 %v691, %v690
    %v716 = vpack.c.bf16 %v693, %v692
    %v717 = vpack.c.bf16 %v695, %v694
    %v718 = vpack.c.bf16 %v697, %v696
    %v719 = vpack.c.bf16 %v699, %v698
    %v720 = vpack.c.bf16 %v701, %v700
    %v721 = vpack.c.bf16 %v703, %v702
    %v722 = vpack.c.bf16 %v705, %v704
    %v723 = vpack.c.bf16 %v707, %v706
    %v724 = vld [vmem:[%s3] sm:$0xf]
    %v725 = vld [vmem:[%s3 + $0x4] sm:$0xf]
    %v726 = vld [vmem:[%s3 + $0x8] sm:$0xf]
    %v727 = vld [vmem:[%s3 + $0xc] sm:$0xf]
    %v728 = vld [vmem:[%s3 + $0x10] sm:$0xf]
    %v729 = vld [vmem:[%s3 + $0x14] sm:$0xf]
    %v730 = vld [vmem:[%s3 + $0x18] sm:$0xf]
    %v731 = vld [vmem:[%s3 + $0x1c] sm:$0xf]
    %v732 = vld [vmem:[%s3 + $0x20] sm:$0xf]
    %v733 = vld [vmem:[%s3 + $0x24] sm:$0xf]
    %v734 = vld [vmem:[%s3 + $0x28] sm:$0xf]
    %v735 = vld [vmem:[%s3 + $0x2c] sm:$0xf]
    %v736 = vld [vmem:[%s3 + $0x30] sm:$0xf]
    %v737 = vld [vmem:[%s3 + $0x34] sm:$0xf]
    %v738 = vld [vmem:[%s3 + $0x38] sm:$0xf]
    %v739 = vld [vmem:[%s3 + $0x3c] sm:$0xf]
    %v740 = vld [vmem:[%s4] sm:$0x1]
    %v742 = vlaneseq
    %v743 = vshrl.u32 %v742, 7
    %v744 = vsub.s32 0, %v743
    %v745 = vrot.slane %v740, %v744
    %v763 = vunpack.c.l.b16 %v724
    %v764 = vunpack.c.l.b16 %v725
    %v765 = vunpack.c.l.b16 %v726
    %v766 = vunpack.c.l.b16 %v727
    %v767 = vunpack.c.l.b16 %v728
    %v768 = vunpack.c.l.b16 %v729
    %v769 = vunpack.c.l.b16 %v730
    %v770 = vunpack.c.l.b16 %v731
    %v771 = vunpack.c.l.b16 %v732
    %v772 = vunpack.c.l.b16 %v733
    %v773 = vunpack.c.l.b16 %v734
    %v774 = vunpack.c.l.b16 %v735
    %v775 = vunpack.c.l.b16 %v736
    %v776 = vunpack.c.l.b16 %v737
    %v777 = vunpack.c.l.b16 %v738
    %v778 = vunpack.c.l.b16 %v739
    %v779 = vpack.c.b16 %v764, %v763
    %v780 = vpack.c.b16 %v766, %v765
    %v781 = vpack.c.b16 %v768, %v767
    %v782 = vpack.c.b16 %v770, %v769
    %v783 = vpack.c.b16 %v772, %v771
    %v784 = vpack.c.b16 %v774, %v773
    %v785 = vpack.c.b16 %v776, %v775
    %v786 = vpack.c.b16 %v778, %v777
    %795 = vmatprep.subr.bf16.mxu0 0
    %796 = vmatpush1.bf16.msra.mxu0 %v786
    %797 = vmatprep.subr.bf16.mxu0 0
    %798 = vmatpush1.bf16.msra.mxu0 %v785
    %799 = vmatprep.subr.bf16.mxu0 0
    %800 = vmatpush1.bf16.msra.mxu0 %v784
    %801 = vmatprep.subr.bf16.mxu0 0
    %802 = vmatpush1.bf16.msra.mxu0 %v783
    %803 = vmatprep.subr.bf16.mxu0 0
    %804 = vmatpush1.bf16.msra.mxu0 %v782
    %805 = vmatprep.subr.bf16.mxu0 0
    %806 = vmatpush1.bf16.msra.mxu0 %v781
    %807 = vmatprep.subr.bf16.mxu0 0
    %808 = vmatpush1.bf16.msra.mxu0 %v780
    %809 = vmatprep.subr.bf16.mxu0 0
    %810 = vmatpush1.bf16.msra.mxu0 %v779
    %811 = vmatprep.subr.bf16.mxu0 0
    %812 = vmatpush2.bf16.msra.mxu0 0
    %813 = vmatprep.subr.bf16.mxu0 0
    %814 = vmatpush2.bf16.msra.mxu0 0
    %815 = vmatprep.subr.bf16.mxu0 0
    %816 = vmatpush2.bf16.msra.mxu0 0
    %817 = vmatprep.subr.bf16.mxu0 0
    %818 = vmatpush2.bf16.msra.mxu0 0
    %819 = vmatprep.subr.bf16.mxu0 0
    %820 = vmatpush2.bf16.msra.mxu0 0
    %821 = vmatprep.subr.bf16.mxu0 0
    %822 = vmatpush2.bf16.msra.mxu0 0
    %823 = vmatprep.subr.bf16.mxu0 0
    %824 = vmatpush2.bf16.msra.mxu0 0
    %825 = vmatprep.subr.bf16.mxu0 0
    %826 = vmatpush2.bf16.msra.mxu0 0
    %827 = vmatprep.mubr.bf16.mxu0 0
    %828 = vmatmul.mubr.bf16.gmra.mxu0 %v708
    %v829 = vpop.f32.mrf.mxu0
    %v830 = vadd.f32 %v745, %v829
    %v831 = vpop.f32.mrf.mxu0
    %v832 = vpop.f32.mrf.mxu0
    %v833 = vadd.f32 %v745, %v832
    %v834 = vpop.f32.mrf.mxu0
    %835 = vmatprep.mubr.bf16.mxu0 0
    %836 = vmatmul.mubr.bf16.gmra.mxu0 %v709
    %v837 = vpop.f32.mrf.mxu0
    %v838 = vadd.f32 %v745, %v837
    %v839 = vpop.f32.mrf.mxu0
    %v840 = vpop.f32.mrf.mxu0
    %v841 = vadd.f32 %v745, %v840
    %v842 = vpop.f32.mrf.mxu0
    %843 = vmatprep.mubr.bf16.mxu0 0
    %844 = vmatmul.mubr.bf16.gmra.mxu0 %v710
    %v845 = vpop.f32.mrf.mxu0
    %v846 = vadd.f32 %v745, %v845
    %v847 = vpop.f32.mrf.mxu0
    %v848 = vpop.f32.mrf.mxu0
    %v849 = vadd.f32 %v745, %v848
    %v850 = vpop.f32.mrf.mxu0
    %851 = vmatprep.mubr.bf16.mxu0 0
    %852 = vmatmul.mubr.bf16.gmra.mxu0 %v711
    %v853 = vpop.f32.mrf.mxu0
    %v854 = vadd.f32 %v745, %v853
    %v855 = vpop.f32.mrf.mxu0
    %v856 = vpop.f32.mrf.mxu0
    %v857 = vadd.f32 %v745, %v856
    %v858 = vpop.f32.mrf.mxu0
    %859 = vmatprep.mubr.bf16.mxu0 0
    %860 = vmatmul.mubr.bf16.gmra.mxu0 %v712
    %v861 = vpop.f32.mrf.mxu0
    %v862 = vadd.f32 %v745, %v861
    %v863 = vpop.f32.mrf.mxu0
    %v864 = vpop.f32.mrf.mxu0
    %v865 = vadd.f32 %v745, %v864
    %v866 = vpop.f32.mrf.mxu0
    %867 = vmatprep.mubr.bf16.mxu0 0
    %868 = vmatmul.mubr.bf16.gmra.mxu0 %v713
    %v869 = vpop.f32.mrf.mxu0
    %v870 = vadd.f32 %v745, %v869
    %v871 = vpop.f32.mrf.mxu0
    %v872 = vpop.f32.mrf.mxu0
    %v873 = vadd.f32 %v745, %v872
    %v874 = vpop.f32.mrf.mxu0
    %875 = vmatprep.mubr.bf16.mxu0 0
    %876 = vmatmul.mubr.bf16.gmra.mxu0 %v714
    %v877 = vpop.f32.mrf.mxu0
    %v878 = vadd.f32 %v745, %v877
    %v879 = vpop.f32.mrf.mxu0
    %v880 = vpop.f32.mrf.mxu0
    %v881 = vadd.f32 %v745, %v880
    %v882 = vpop.f32.mrf.mxu0
    %883 = vmatprep.mubr.bf16.mxu0 0
    %884 = vmatmul.mubr.bf16.gmra.mxu0 %v715
    %v885 = vpop.f32.mrf.mxu0
    %v886 = vadd.f32 %v745, %v885
    %v887 = vpop.f32.mrf.mxu0
    %v888 = vpop.f32.mrf.mxu0
    %v889 = vadd.f32 %v745, %v888
    %v890 = vpop.f32.mrf.mxu0
    %891 = vmatprep.mubr.bf16.mxu0 0
    %892 = vmatmul.mubr.bf16.gmra.mxu0 %v716
    %v893 = vpop.f32.mrf.mxu0
    %v894 = vadd.f32 %v745, %v893
    %v895 = vpop.f32.mrf.mxu0
    %v896 = vpop.f32.mrf.mxu0
    %v897 = vadd.f32 %v745, %v896
    %v898 = vpop.f32.mrf.mxu0
    %899 = vmatprep.mubr.bf16.mxu0 0
    %900 = vmatmul.mubr.bf16.gmra.mxu0 %v717
    %v901 = vpop.f32.mrf.mxu0
    %v902 = vadd.f32 %v745, %v901
    %v903 = vpop.f32.mrf.mxu0
    %v904 = vpop.f32.mrf.mxu0
    %v905 = vadd.f32 %v745, %v904
    %v906 = vpop.f32.mrf.mxu0
    %907 = vmatprep.mubr.bf16.mxu0 0
    %908 = vmatmul.mubr.bf16.gmra.mxu0 %v718
    %v909 = vpop.f32.mrf.mxu0
    %v910 = vadd.f32 %v745, %v909
    %v911 = vpop.f32.mrf.mxu0
    %v912 = vpop.f32.mrf.mxu0
    %v913 = vadd.f32 %v745, %v912
    %v914 = vpop.f32.mrf.mxu0
    %915 = vmatprep.mubr.bf16.mxu0 0
    %916 = vmatmul.mubr.bf16.gmra.mxu0 %v719
    %v917 = vpop.f32.mrf.mxu0
    %v918 = vadd.f32 %v745, %v917
    %v919 = vpop.f32.mrf.mxu0
    %v920 = vpop.f32.mrf.mxu0
    %v921 = vadd.f32 %v745, %v920
    %v922 = vpop.f32.mrf.mxu0
    %923 = vmatprep.mubr.bf16.mxu0 0
    %924 = vmatmul.mubr.bf16.gmra.mxu0 %v720
    %v925 = vpop.f32.mrf.mxu0
    %v926 = vadd.f32 %v745, %v925
    %v927 = vpop.f32.mrf.mxu0
    %v928 = vpop.f32.mrf.mxu0
    %v929 = vadd.f32 %v745, %v928
    %v930 = vpop.f32.mrf.mxu0
    %931 = vmatprep.mubr.bf16.mxu0 0
    %932 = vmatmul.mubr.bf16.gmra.mxu0 %v721
    %v933 = vpop.f32.mrf.mxu0
    %v934 = vadd.f32 %v745, %v933
    %v935 = vpop.f32.mrf.mxu0
    %v936 = vpop.f32.mrf.mxu0
    %v937 = vadd.f32 %v745, %v936
    %v938 = vpop.f32.mrf.mxu0
    %939 = vmatprep.mubr.bf16.mxu0 0
    %940 = vmatmul.mubr.bf16.gmra.mxu0 %v722
    %v941 = vpop.f32.mrf.mxu0
    %v942 = vadd.f32 %v745, %v941
    %v943 = vpop.f32.mrf.mxu0
    %v944 = vpop.f32.mrf.mxu0
    %v945 = vadd.f32 %v745, %v944
    %v946 = vpop.f32.mrf.mxu0
    %947 = vmatprep.mubr.bf16.mxu0 0
    %948 = vmatmul.mubr.bf16.gmra.mxu0 %v723
    %v949 = vpop.f32.mrf.mxu0
    %v950 = vadd.f32 %v745, %v949
    %v951 = vpop.f32.mrf.mxu0
    %v952 = vpop.f32.mrf.mxu0
    %v953 = vadd.f32 %v745, %v952
    %v954 = vpop.f32.mrf.mxu0
    %955 = vdwg.mxu0
    %956 = vst [vmem:[%s5] sm:$0xff] %v830
    %957 = vst [vmem:[%s5 + $0x8] sm:$0xff] %v833
    %958 = vst [vmem:[%s5 + $0x10] sm:$0xff] %v838
    %959 = vst [vmem:[%s5 + $0x18] sm:$0xff] %v841
    %960 = vst [vmem:[%s5 + $0x20] sm:$0xff] %v846
    %961 = vst [vmem:[%s5 + $0x28] sm:$0xff] %v849
    %962 = vst [vmem:[%s5 + $0x30] sm:$0xff] %v854
    %963 = vst [vmem:[%s5 + $0x38] sm:$0xff] %v857
    %964 = vst [vmem:[%s5 + $0x40] sm:$0xff] %v862
    %965 = vst [vmem:[%s5 + $0x48] sm:$0xff] %v865
    %966 = vst [vmem:[%s5 + $0x50] sm:$0xff] %v870
    %967 = vst [vmem:[%s5 + $0x58] sm:$0xff] %v873
    %968 = vst [vmem:[%s5 + $0x60] sm:$0xff] %v878
    %969 = vst [vmem:[%s5 + $0x68] sm:$0xff] %v881
    %970 = vst [vmem:[%s5 + $0x70] sm:$0xff] %v886
    %971 = vst [vmem:[%s5 + $0x78] sm:$0xff] %v889
    %972 = vst [vmem:[%s5 + $0x80] sm:$0xff] %v894
    %973 = vst [vmem:[%s5 + $0x88] sm:$0xff] %v897
    %974 = vst [vmem:[%s5 + $0x90] sm:$0xff] %v902
    %975 = vst [vmem:[%s5 + $0x98] sm:$0xff] %v905
    %976 = vst [vmem:[%s5 + $0xa0] sm:$0xff] %v910
    %977 = vst [vmem:[%s5 + $0xa8] sm:$0xff] %v913
    %978 = vst [vmem:[%s5 + $0xb0] sm:$0xff] %v918
    %979 = vst [vmem:[%s5 + $0xb8] sm:$0xff] %v921
    %980 = vst [vmem:[%s5 + $0xc0] sm:$0xff] %v926
    %981 = vst [vmem:[%s5 + $0xc8] sm:$0xff] %v929
    %982 = vst [vmem:[%s5 + $0xd0] sm:$0xff] %v934
    %983 = vst [vmem:[%s5 + $0xd8] sm:$0xff] %v937
    %984 = vst [vmem:[%s5 + $0xe0] sm:$0xff] %v942
    %985 = vst [vmem:[%s5 + $0xe8] sm:$0xff] %v945
    %986 = vst [vmem:[%s5 + $0xf0] sm:$0xff] %v950
    %987 = vst [vmem:[%s5 + $0xf8] sm:$0xff] %v953
  $region29: #{gcn_forward.5} parent=0 // pred_fallthru
    _
  // Predicated region
  $region30: #{gcn_forward.5} parent=0 // pred_check
    _
  $region31: #{gcn_forward.5} parent=0 // pred_check_branch
    %989 = sbr.rel (0) target = $region33
  $region32: #{gcn_forward.5} parent=0 // pred_region
    _
  $region33: #{gcn_forward.5} parent=0 // pred_fallthru
    _
  // Predicated region
  $region34: #{gcn_forward.5} parent=0 // pred_check
    _
  $region35: #{gcn_forward.5} parent=0 // pred_check_branch
    %991 = sbr.rel (0) target = $region37
  $region36: #{gcn_forward.5} parent=0 // pred_region
    _
  $region37: #{gcn_forward.5} parent=0 // pred_fallthru
    _

// kernel: gcn_forward.4
$region0: #{gcn_forward.4}
  #allocation0 [shape = 'u32[]', space=smem, size = 0x4, offset = 0x4, fixed_abs, tag = 'smem constant byte address 0x4 - core index']
  #allocation1 [shape = 'u32[144,128]{1,0:T(1,128)}', space=vmem, size = 0x12000, scoped, tag = 'internal scratch']
  #allocation2 [shape = 'f32[256,128]{1,0:T(8,128)}', space=vmem, size = 0x20000, scoped, tag = 'scratch operand']
  %s0 = inlined_call_operand.vmem [shape: bf16[256,256], index: 0, kind: input, shape index: {}]
  %s1 = inlined_call_operand.vmem [shape: bf16[256,128], index: 1, kind: input, shape index: {}]
  %s2 = inlined_call_operand.vmem [shape: f32[1,128], index: 2, kind: input, shape index: {}]
  %s3 = inlined_call_operand.vmem [shape: bf16[128,128], index: 3, kind: input, shape index: {}]
  %s4 = inlined_call_operand.vmem [shape: f32[1,128], index: 4, kind: input, shape index: {}]
  %s5 = inlined_call_operand.vmem [shape: bf16[256,128], index: 5, kind: output, shape index: {}]
  %s6 = sld [smem:[#allocation0]]
  $region38: #{gcn_forward.4} parent=0
    _
  %s8 = ssub.s32 1, %s6
  %s9 = scalar_select 0, %s8, %s6
  // Predicated region
  $region2: #{gcn_forward.4} parent=0 // pred_check
    _
  $region3: #{gcn_forward.4} parent=0 // pred_check_branch
    %11 = sbr.rel (0) target = $region5
  $region4: #{gcn_forward.4} parent=0 // pred_region
    _
  $region5: #{gcn_forward.4} parent=0 // pred_fallthru
    _
  // Predicated region
  $region6: #{gcn_forward.4} parent=0 // pred_check
    _
  $region7: #{gcn_forward.4} parent=0 // pred_check_branch
    %13 = sbr.rel (0) target = $region9
  $region8: #{gcn_forward.4} parent=0 // pred_region
    _
  $region9: #{gcn_forward.4} parent=0 // pred_fallthru
    _
  // Predicated region
  $region10: #{gcn_forward.4} parent=0 // pred_check
    _
  $region11: #{gcn_forward.4} parent=0 // pred_check_branch
    %15 = sbr.rel (0) target = $region13
  $region12: #{gcn_forward.4} parent=0 // pred_region
    _
  $region13: #{gcn_forward.4} parent=0 // pred_fallthru
    _
  // Predicated region
  $region14: #{gcn_forward.4} parent=0 // pred_check
    _
  $region15: #{gcn_forward.4} parent=0 // pred_check_branch
    %17 = sbr.rel (0) target = $region17
  $region16: #{gcn_forward.4} parent=0 // pred_region
    _
  $region17: #{gcn_forward.4} parent=0 // pred_fallthru
    _
  // Predicated region
  $region18: #{gcn_forward.4} parent=0 // pred_check
    _
  $region19: #{gcn_forward.4} parent=0 // pred_check_branch
    %19 = sbr.rel (0) target = $region21
  $region20: #{gcn_forward.4} parent=0 // pred_region
    _
  $region21: #{gcn_forward.4} parent=0 // pred_fallthru
    _
  %p21 = scmp.eq.s32.totalorder 0, 0
  // Predicated region
  $region22: #{gcn_forward.4} parent=0 // pred_check
    %p22 = pneg %p21
  $region23: #{gcn_forward.4} parent=0 // pred_check_branch
    %24 = sbr.rel (%p22) target = $region25
  $region24: #{gcn_forward.4} parent=0 // pred_region
    %25 = vst [vmem:[#allocation2] sm:$0xff] 0.0
    %26 = vst [vmem:[#allocation2 + $0x8] sm:$0xff] 0.0
    %27 = vst [vmem:[#allocation2 + $0x10] sm:$0xff] 0.0
    %28 = vst [vmem:[#allocation2 + $0x18] sm:$0xff] 0.0
    %29 = vst [vmem:[#allocation2 + $0x20] sm:$0xff] 0.0
    %30 = vst [vmem:[#allocation2 + $0x28] sm:$0xff] 0.0
    %31 = vst [vmem:[#allocation2 + $0x30] sm:$0xff] 0.0
    %32 = vst [vmem:[#allocation2 + $0x38] sm:$0xff] 0.0
    %33 = vst [vmem:[#allocation2 + $0x40] sm:$0xff] 0.0
    %34 = vst [vmem:[#allocation2 + $0x48] sm:$0xff] 0.0
    %35 = vst [vmem:[#allocation2 + $0x50] sm:$0xff] 0.0
    %36 = vst [vmem:[#allocation2 + $0x58] sm:$0xff] 0.0
    %37 = vst [vmem:[#allocation2 + $0x60] sm:$0xff] 0.0
    %38 = vst [vmem:[#allocation2 + $0x68] sm:$0xff] 0.0
    %39 = vst [vmem:[#allocation2 + $0x70] sm:$0xff] 0.0
    %40 = vst [vmem:[#allocation2 + $0x78] sm:$0xff] 0.0
    %41 = vst [vmem:[#allocation2 + $0x80] sm:$0xff] 0.0
    %42 = vst [vmem:[#allocation2 + $0x88] sm:$0xff] 0.0
    %43 = vst [vmem:[#allocation2 + $0x90] sm:$0xff] 0.0
    %44 = vst [vmem:[#allocation2 + $0x98] sm:$0xff] 0.0
    %45 = vst [vmem:[#allocation2 + $0xa0] sm:$0xff] 0.0
    %46 = vst [vmem:[#allocation2 + $0xa8] sm:$0xff] 0.0
    %47 = vst [vmem:[#allocation2 + $0xb0] sm:$0xff] 0.0
    %48 = vst [vmem:[#allocation2 + $0xb8] sm:$0xff] 0.0
    %49 = vst [vmem:[#allocation2 + $0xc0] sm:$0xff] 0.0
    %50 = vst [vmem:[#allocation2 + $0xc8] sm:$0xff] 0.0
    %51 = vst [vmem:[#allocation2 + $0xd0] sm:$0xff] 0.0
    %52 = vst [vmem:[#allocation2 + $0xd8] sm:$0xff] 0.0
    %53 = vst [vmem:[#allocation2 + $0xe0] sm:$0xff] 0.0
    %54 = vst [vmem:[#allocation2 + $0xe8] sm:$0xff] 0.0
    %55 = vst [vmem:[#allocation2 + $0xf0] sm:$0xff] 0.0
    %56 = vst [vmem:[#allocation2 + $0xf8] sm:$0xff] 0.0
  $region25: #{gcn_forward.4} parent=0 // pred_fallthru
    _
  %v57 = vld [vmem:[#allocation2] sm:$0xff]
  %v58 = vld [vmem:[#allocation2 + $0x8] sm:$0xff]
  %v59 = vld [vmem:[#allocation2 + $0x10] sm:$0xff]
  %v60 = vld [vmem:[#allocation2 + $0x18] sm:$0xff]
  %v61 = vld [vmem:[#allocation2 + $0x20] sm:$0xff]
  %v62 = vld [vmem:[#allocation2 + $0x28] sm:$0xff]
  %v63 = vld [vmem:[#allocation2 + $0x30] sm:$0xff]
  %v64 = vld [vmem:[#allocation2 + $0x38] sm:$0xff]
  %v65 = vld [vmem:[#allocation2 + $0x40] sm:$0xff]
  %v66 = vld [vmem:[#allocation2 + $0x48] sm:$0xff]
  %v67 = vld [vmem:[#allocation2 + $0x50] sm:$0xff]
  %v68 = vld [vmem:[#allocation2 + $0x58] sm:$0xff]
  %v69 = vld [vmem:[#allocation2 + $0x60] sm:$0xff]
  %v70 = vld [vmem:[#allocation2 + $0x68] sm:$0xff]
  %v71 = vld [vmem:[#allocation2 + $0x70] sm:$0xff]
  %v72 = vld [vmem:[#allocation2 + $0x78] sm:$0xff]
  %v73 = vld [vmem:[#allocation2 + $0x80] sm:$0xff]
  %v74 = vld [vmem:[#allocation2 + $0x88] sm:$0xff]
  %v75 = vld [vmem:[#allocation2 + $0x90] sm:$0xff]
  %v76 = vld [vmem:[#allocation2 + $0x98] sm:$0xff]
  %v77 = vld [vmem:[#allocation2 + $0xa0] sm:$0xff]
  %v78 = vld [vmem:[#allocation2 + $0xa8] sm:$0xff]
  %v79 = vld [vmem:[#allocation2 + $0xb0] sm:$0xff]
  %v80 = vld [vmem:[#allocation2 + $0xb8] sm:$0xff]
  %v81 = vld [vmem:[#allocation2 + $0xc0] sm:$0xff]
  %v82 = vld [vmem:[#allocation2 + $0xc8] sm:$0xff]
  %v83 = vld [vmem:[#allocation2 + $0xd0] sm:$0xff]
  %v84 = vld [vmem:[#allocation2 + $0xd8] sm:$0xff]
  %v85 = vld [vmem:[#allocation2 + $0xe0] sm:$0xff]
  %v86 = vld [vmem:[#allocation2 + $0xe8] sm:$0xff]
  %v87 = vld [vmem:[#allocation2 + $0xf0] sm:$0xff]
  %v88 = vld [vmem:[#allocation2 + $0xf8] sm:$0xff]
  %v89 = vld [vmem:[%s0] sm:$0xff]
  %v90 = vld [vmem:[%s0 + $0x8] sm:$0xff]
  %v91 = vld [vmem:[%s0 + $0x10] sm:$0xff]
  %v92 = vld [vmem:[%s0 + $0x18] sm:$0xff]
  %v93 = vld [vmem:[%s0 + $0x20] sm:$0xff]
  %v94 = vld [vmem:[%s0 + $0x28] sm:$0xff]
  %v95 = vld [vmem:[%s0 + $0x30] sm:$0xff]
  %v96 = vld [vmem:[%s0 + $0x38] sm:$0xff]
  %v97 = vld [vmem:[%s0 + $0x40] sm:$0xff]
  %v98 = vld [vmem:[%s0 + $0x48] sm:$0xff]
  %v99 = vld [vmem:[%s0 + $0x50] sm:$0xff]
  %v100 = vld [vmem:[%s0 + $0x58] sm:$0xff]
  %v101 = vld [vmem:[%s0 + $0x60] sm:$0xff]
  %v102 = vld [vmem:[%s0 + $0x68] sm:$0xff]
  %v103 = vld [vmem:[%s0 + $0x70] sm:$0xff]
  %v104 = vld [vmem:[%s0 + $0x78] sm:$0xff]
  %v105 = vld [vmem:[%s0 + $0x80] sm:$0xff]
  %v106 = vld [vmem:[%s0 + $0x88] sm:$0xff]
  %v107 = vld [vmem:[%s0 + $0x90] sm:$0xff]
  %v108 = vld [vmem:[%s0 + $0x98] sm:$0xff]
  %v109 = vld [vmem:[%s0 + $0xa0] sm:$0xff]
  %v110 = vld [vmem:[%s0 + $0xa8] sm:$0xff]
  %v111 = vld [vmem:[%s0 + $0xb0] sm:$0xff]
  %v112 = vld [vmem:[%s0 + $0xb8] sm:$0xff]
  %v113 = vld [vmem:[%s0 + $0xc0] sm:$0xff]
  %v114 = vld [vmem:[%s0 + $0xc8] sm:$0xff]
  %v115 = vld [vmem:[%s0 + $0xd0] sm:$0xff]
  %v116 = vld [vmem:[%s0 + $0xd8] sm:$0xff]
  %v117 = vld [vmem:[%s0 + $0xe0] sm:$0xff]
  %v118 = vld [vmem:[%s0 + $0xe8] sm:$0xff]
  %v119 = vld [vmem:[%s0 + $0xf0] sm:$0xff]
  %v120 = vld [vmem:[%s0 + $0xf8] sm:$0xff]
  %v121 = vld [vmem:[%s1] sm:$0xf]
  %v122 = vld [vmem:[%s1 + $0x4] sm:$0xf]
  %v123 = vld [vmem:[%s1 + $0x8] sm:$0xf]
  %v124 = vld [vmem:[%s1 + $0xc] sm:$0xf]
  %v125 = vld [vmem:[%s1 + $0x10] sm:$0xf]
  %v126 = vld [vmem:[%s1 + $0x14] sm:$0xf]
  %v127 = vld [vmem:[%s1 + $0x18] sm:$0xf]
  %v128 = vld [vmem:[%s1 + $0x1c] sm:$0xf]
  %v129 = vld [vmem:[%s1 + $0x20] sm:$0xf]
  %v130 = vld [vmem:[%s1 + $0x24] sm:$0xf]
  %v131 = vld [vmem:[%s1 + $0x28] sm:$0xf]
  %v132 = vld [vmem:[%s1 + $0x2c] sm:$0xf]
  %v133 = vld [vmem:[%s1 + $0x30] sm:$0xf]
  %v134 = vld [vmem:[%s1 + $0x34] sm:$0xf]
  %v135 = vld [vmem:[%s1 + $0x38] sm:$0xf]
  %v136 = vld [vmem:[%s1 + $0x3c] sm:$0xf]
  %v137 = vld [vmem:[%s1 + $0x40] sm:$0xf]
  %v138 = vld [vmem:[%s1 + $0x44] sm:$0xf]
  %v139 = vld [vmem:[%s1 + $0x48] sm:$0xf]
  %v140 = vld [vmem:[%s1 + $0x4c] sm:$0xf]
  %v141 = vld [vmem:[%s1 + $0x50] sm:$0xf]
  %v142 = vld [vmem:[%s1 + $0x54] sm:$0xf]
  %v143 = vld [vmem:[%s1 + $0x58] sm:$0xf]
  %v144 = vld [vmem:[%s1 + $0x5c] sm:$0xf]
  %v145 = vld [vmem:[%s1 + $0x60] sm:$0xf]
  %v146 = vld [vmem:[%s1 + $0x64] sm:$0xf]
  %v147 = vld [vmem:[%s1 + $0x68] sm:$0xf]
  %v148 = vld [vmem:[%s1 + $0x6c] sm:$0xf]
  %v149 = vld [vmem:[%s1 + $0x70] sm:$0xf]
  %v150 = vld [vmem:[%s1 + $0x74] sm:$0xf]
  %v151 = vld [vmem:[%s1 + $0x78] sm:$0xf]
  %v152 = vld [vmem:[%s1 + $0x7c] sm:$0xf]
  %v185 = vunpack.c.l.b16 %v89
  %v186 = vunpack.c.h.b16 %v89
  %v187 = vunpack.c.l.b16 %v90
  %v188 = vunpack.c.h.b16 %v90
  %v189 = vunpack.c.l.b16 %v91
  %v190 = vunpack.c.h.b16 %v91
  %v191 = vunpack.c.l.b16 %v92
  %v192 = vunpack.c.h.b16 %v92
  %v193 = vunpack.c.l.b16 %v93
  %v194 = vunpack.c.h.b16 %v93
  %v195 = vunpack.c.l.b16 %v94
  %v196 = vunpack.c.h.b16 %v94
  %v197 = vunpack.c.l.b16 %v95
  %v198 = vunpack.c.h.b16 %v95
  %v199 = vunpack.c.l.b16 %v96
  %v200 = vunpack.c.h.b16 %v96
  %v201 = vunpack.c.l.b16 %v97
  %v202 = vunpack.c.h.b16 %v97
  %v203 = vunpack.c.l.b16 %v98
  %v204 = vunpack.c.h.b16 %v98
  %v205 = vunpack.c.l.b16 %v99
  %v206 = vunpack.c.h.b16 %v99
  %v207 = vunpack.c.l.b16 %v100
  %v208 = vunpack.c.h.b16 %v100
  %v209 = vunpack.c.l.b16 %v101
  %v210 = vunpack.c.h.b16 %v101
  %v211 = vunpack.c.l.b16 %v102
  %v212 = vunpack.c.h.b16 %v102
  %v213 = vunpack.c.l.b16 %v103
  %v214 = vunpack.c.h.b16 %v103
  %v215 = vunpack.c.l.b16 %v104
  %v216 = vunpack.c.h.b16 %v104
  %v217 = vunpack.c.l.b16 %v105
  %v218 = vunpack.c.h.b16 %v105
  %v219 = vunpack.c.l.b16 %v106
  %v220 = vunpack.c.h.b16 %v106
  %v221 = vunpack.c.l.b16 %v107
  %v222 = vunpack.c.h.b16 %v107
  %v223 = vunpack.c.l.b16 %v108
  %v224 = vunpack.c.h.b16 %v108
  %v225 = vunpack.c.l.b16 %v109
  %v226 = vunpack.c.h.b16 %v109
  %v227 = vunpack.c.l.b16 %v110
  %v228 = vunpack.c.h.b16 %v110
  %v229 = vunpack.c.l.b16 %v111
  %v230 = vunpack.c.h.b16 %v111
  %v231 = vunpack.c.l.b16 %v112
  %v232 = vunpack.c.h.b16 %v112
  %v233 = vunpack.c.l.b16 %v113
  %v234 = vunpack.c.h.b16 %v113
  %v235 = vunpack.c.l.b16 %v114
  %v236 = vunpack.c.h.b16 %v114
  %v237 = vunpack.c.l.b16 %v115
  %v238 = vunpack.c.h.b16 %v115
  %v239 = vunpack.c.l.b16 %v116
  %v240 = vunpack.c.h.b16 %v116
  %v241 = vunpack.c.l.b16 %v117
  %v242 = vunpack.c.h.b16 %v117
  %v243 = vunpack.c.l.b16 %v118
  %v244 = vunpack.c.h.b16 %v118
  %v245 = vunpack.c.l.b16 %v119
  %v246 = vunpack.c.h.b16 %v119
  %v247 = vunpack.c.l.b16 %v120
  %v248 = vunpack.c.h.b16 %v120
  %v249 = vpack.c.b16 %v187, %v185
  %v250 = vpack.c.b16 %v188, %v186
  %v251 = vpack.c.b16 %v191, %v189
  %v252 = vpack.c.b16 %v192, %v190
  %v253 = vpack.c.b16 %v195, %v193
  %v254 = vpack.c.b16 %v196, %v194
  %v255 = vpack.c.b16 %v199, %v197
  %v256 = vpack.c.b16 %v200, %v198
  %v257 = vpack.c.b16 %v203, %v201
  %v258 = vpack.c.b16 %v204, %v202
  %v259 = vpack.c.b16 %v207, %v205
  %v260 = vpack.c.b16 %v208, %v206
  %v261 = vpack.c.b16 %v211, %v209
  %v262 = vpack.c.b16 %v212, %v210
  %v263 = vpack.c.b16 %v215, %v213
  %v264 = vpack.c.b16 %v216, %v214
  %v265 = vpack.c.b16 %v219, %v217
  %v266 = vpack.c.b16 %v220, %v218
  %v267 = vpack.c.b16 %v223, %v221
  %v268 = vpack.c.b16 %v224, %v222
  %v269 = vpack.c.b16 %v227, %v225
  %v270 = vpack.c.b16 %v228, %v226
  %v271 = vpack.c.b16 %v231, %v229
  %v272 = vpack.c.b16 %v232, %v230
  %v273 = vpack.c.b16 %v235, %v233
  %v274 = vpack.c.b16 %v236, %v234
  %v275 = vpack.c.b16 %v239, %v237
  %v276 = vpack.c.b16 %v240, %v238
  %v277 = vpack.c.b16 %v243, %v241
  %v278 = vpack.c.b16 %v244, %v242
  %v279 = vpack.c.b16 %v247, %v245
  %v280 = vpack.c.b16 %v248, %v246
  %v345 = vunpack.c.l.b16 %v121
  %v346 = vunpack.c.l.b16 %v122
  %v347 = vunpack.c.l.b16 %v123
  %v348 = vunpack.c.l.b16 %v124
  %v349 = vunpack.c.l.b16 %v125
  %v350 = vunpack.c.l.b16 %v126
  %v351 = vunpack.c.l.b16 %v127
  %v352 = vunpack.c.l.b16 %v128
  %v353 = vunpack.c.l.b16 %v129
  %v354 = vunpack.c.l.b16 %v130
  %v355 = vunpack.c.l.b16 %v131
  %v356 = vunpack.c.l.b16 %v132
  %v357 = vunpack.c.l.b16 %v133
  %v358 = vunpack.c.l.b16 %v134
  %v359 = vunpack.c.l.b16 %v135
  %v360 = vunpack.c.l.b16 %v136
  %v361 = vunpack.c.l.b16 %v137
  %v362 = vunpack.c.l.b16 %v138
  %v363 = vunpack.c.l.b16 %v139
  %v364 = vunpack.c.l.b16 %v140
  %v365 = vunpack.c.l.b16 %v141
  %v366 = vunpack.c.l.b16 %v142
  %v367 = vunpack.c.l.b16 %v143
  %v368 = vunpack.c.l.b16 %v144
  %v369 = vunpack.c.l.b16 %v145
  %v370 = vunpack.c.l.b16 %v146
  %v371 = vunpack.c.l.b16 %v147
  %v372 = vunpack.c.l.b16 %v148
  %v373 = vunpack.c.l.b16 %v149
  %v374 = vunpack.c.l.b16 %v150
  %v375 = vunpack.c.l.b16 %v151
  %v376 = vunpack.c.l.b16 %v152
  %v377 = vpack.c.b16 %v346, %v345
  %v378 = vpack.c.b16 %v348, %v347
  %v379 = vpack.c.b16 %v350, %v349
  %v380 = vpack.c.b16 %v352, %v351
  %v381 = vpack.c.b16 %v354, %v353
  %v382 = vpack.c.b16 %v356, %v355
  %v383 = vpack.c.b16 %v358, %v357
  %v384 = vpack.c.b16 %v360, %v359
  %v385 = vpack.c.b16 %v362, %v361
  %v386 = vpack.c.b16 %v364, %v363
  %v387 = vpack.c.b16 %v366, %v365
  %v388 = vpack.c.b16 %v368, %v367
  %v389 = vpack.c.b16 %v370, %v369
  %v390 = vpack.c.b16 %v372, %v371
  %v391 = vpack.c.b16 %v374, %v373
  %v392 = vpack.c.b16 %v376, %v375
  %409 = vmatprep.subr.bf16.mxu0 0
  %410 = vmatpush1.bf16.msra.mxu0 %v384
  %411 = vmatprep.subr.bf16.mxu0 0
  %412 = vmatpush1.bf16.msra.mxu0 %v383
  %413 = vmatprep.subr.bf16.mxu0 0
  %414 = vmatpush1.bf16.msra.mxu0 %v382
  %415 = vmatprep.subr.bf16.mxu0 0
  %416 = vmatpush1.bf16.msra.mxu0 %v381
  %417 = vmatprep.subr.bf16.mxu0 0
  %418 = vmatpush1.bf16.msra.mxu0 %v380
  %419 = vmatprep.subr.bf16.mxu0 0
  %420 = vmatpush1.bf16.msra.mxu0 %v379
  %421 = vmatprep.subr.bf16.mxu0 0
  %422 = vmatpush1.bf16.msra.mxu0 %v378
  %423 = vmatprep.subr.bf16.mxu0 0
  %424 = vmatpush1.bf16.msra.mxu0 %v377
  %425 = vmatprep.subr.bf16.mxu0 0
  %426 = vmatpush2.bf16.msra.mxu0 %v392
  %427 = vmatprep.subr.bf16.mxu0 0
  %428 = vmatpush2.bf16.msra.mxu0 %v391
  %429 = vmatprep.subr.bf16.mxu0 0
  %430 = vmatpush2.bf16.msra.mxu0 %v390
  %431 = vmatprep.subr.bf16.mxu0 0
  %432 = vmatpush2.bf16.msra.mxu0 %v389
  %433 = vmatprep.subr.bf16.mxu0 0
  %434 = vmatpush2.bf16.msra.mxu0 %v388
  %435 = vmatprep.subr.bf16.mxu0 0
  %436 = vmatpush2.bf16.msra.mxu0 %v387
  %437 = vmatprep.subr.bf16.mxu0 0
  %438 = vmatpush2.bf16.msra.mxu0 %v386
  %439 = vmatprep.subr.bf16.mxu0 0
  %440 = vmatpush2.bf16.msra.mxu0 %v385
  %441 = vmatprep.mubr.bf16.mxu0 %v250
  %442 = vmatmul.mubr.bf16.gmra.mxu0 %v249
  %v443 = vpop.f32.mrf.mxu0
  %v444 = vadd.f32 0.0, %v443
  %v445 = vpop.f32.mrf.mxu0
  %v446 = vpop.f32.mrf.mxu0
  %v447 = vadd.f32 0.0, %v446
  %v448 = vpop.f32.mrf.mxu0
  %449 = vmatprep.mubr.bf16.mxu0 %v252
  %450 = vmatmul.mubr.bf16.gmra.mxu0 %v251
  %v451 = vpop.f32.mrf.mxu0
  %v452 = vadd.f32 0.0, %v451
  %v453 = vpop.f32.mrf.mxu0
  %v454 = vpop.f32.mrf.mxu0
  %v455 = vadd.f32 0.0, %v454
  %v456 = vpop.f32.mrf.mxu0
  %457 = vmatprep.mubr.bf16.mxu0 %v254
  %458 = vmatmul.mubr.bf16.gmra.mxu0 %v253
  %v459 = vpop.f32.mrf.mxu0
  %v460 = vadd.f32 0.0, %v459
  %v461 = vpop.f32.mrf.mxu0
  %v462 = vpop.f32.mrf.mxu0
  %v463 = vadd.f32 0.0, %v462
  %v464 = vpop.f32.mrf.mxu0
  %465 = vmatprep.mubr.bf16.mxu0 %v256
  %466 = vmatmul.mubr.bf16.gmra.mxu0 %v255
  %v467 = vpop.f32.mrf.mxu0
  %v468 = vadd.f32 0.0, %v467
  %v469 = vpop.f32.mrf.mxu0
  %v470 = vpop.f32.mrf.mxu0
  %v471 = vadd.f32 0.0, %v470
  %v472 = vpop.f32.mrf.mxu0
  %473 = vmatprep.mubr.bf16.mxu0 %v258
  %474 = vmatmul.mubr.bf16.gmra.mxu0 %v257
  %v475 = vpop.f32.mrf.mxu0
  %v476 = vadd.f32 0.0, %v475
  %v477 = vpop.f32.mrf.mxu0
  %v478 = vpop.f32.mrf.mxu0
  %v479 = vadd.f32 0.0, %v478
  %v480 = vpop.f32.mrf.mxu0
  %481 = vmatprep.mubr.bf16.mxu0 %v260
  %482 = vmatmul.mubr.bf16.gmra.mxu0 %v259
  %v483 = vpop.f32.mrf.mxu0
  %v484 = vadd.f32 0.0, %v483
  %v485 = vpop.f32.mrf.mxu0
  %v486 = vpop.f32.mrf.mxu0
  %v487 = vadd.f32 0.0, %v486
  %v488 = vpop.f32.mrf.mxu0
  %489 = vmatprep.mubr.bf16.mxu0 %v262
  %490 = vmatmul.mubr.bf16.gmra.mxu0 %v261
  %v491 = vpop.f32.mrf.mxu0
  %v492 = vadd.f32 0.0, %v491
  %v493 = vpop.f32.mrf.mxu0
  %v494 = vpop.f32.mrf.mxu0
  %v495 = vadd.f32 0.0, %v494
  %v496 = vpop.f32.mrf.mxu0
  %497 = vmatprep.mubr.bf16.mxu0 %v264
  %498 = vmatmul.mubr.bf16.gmra.mxu0 %v263
  %v499 = vpop.f32.mrf.mxu0
  %v500 = vadd.f32 0.0, %v499
  %v501 = vpop.f32.mrf.mxu0
  %v502 = vpop.f32.mrf.mxu0
  %v503 = vadd.f32 0.0, %v502
  %v504 = vpop.f32.mrf.mxu0
  %505 = vmatprep.mubr.bf16.mxu0 %v266
  %506 = vmatmul.mubr.bf16.gmra.mxu0 %v265
  %v507 = vpop.f32.mrf.mxu0
  %v508 = vadd.f32 0.0, %v507
  %v509 = vpop.f32.mrf.mxu0
  %v510 = vpop.f32.mrf.mxu0
  %v511 = vadd.f32 0.0, %v510
  %v512 = vpop.f32.mrf.mxu0
  %513 = vmatprep.mubr.bf16.mxu0 %v268
  %514 = vmatmul.mubr.bf16.gmra.mxu0 %v267
  %v515 = vpop.f32.mrf.mxu0
  %v516 = vadd.f32 0.0, %v515
  %v517 = vpop.f32.mrf.mxu0
  %v518 = vpop.f32.mrf.mxu0
  %v519 = vadd.f32 0.0, %v518
  %v520 = vpop.f32.mrf.mxu0
  %521 = vmatprep.mubr.bf16.mxu0 %v270
  %522 = vmatmul.mubr.bf16.gmra.mxu0 %v269
  %v523 = vpop.f32.mrf.mxu0
  %v524 = vadd.f32 0.0, %v523
  %v525 = vpop.f32.mrf.mxu0
  %v526 = vpop.f32.mrf.mxu0
  %v527 = vadd.f32 0.0, %v526
  %v528 = vpop.f32.mrf.mxu0
  %529 = vmatprep.mubr.bf16.mxu0 %v272
  %530 = vmatmul.mubr.bf16.gmra.mxu0 %v271
  %v531 = vpop.f32.mrf.mxu0
  %v532 = vadd.f32 0.0, %v531
  %v533 = vpop.f32.mrf.mxu0
  %v534 = vpop.f32.mrf.mxu0
  %v535 = vadd.f32 0.0, %v534
  %v536 = vpop.f32.mrf.mxu0
  %537 = vmatprep.mubr.bf16.mxu0 %v274
  %538 = vmatmul.mubr.bf16.gmra.mxu0 %v273
  %v539 = vpop.f32.mrf.mxu0
  %v540 = vadd.f32 0.0, %v539
  %v541 = vpop.f32.mrf.mxu0
  %v542 = vpop.f32.mrf.mxu0
  %v543 = vadd.f32 0.0, %v542
  %v544 = vpop.f32.mrf.mxu0
  %545 = vmatprep.mubr.bf16.mxu0 %v276
  %546 = vmatmul.mubr.bf16.gmra.mxu0 %v275
  %v547 = vpop.f32.mrf.mxu0
  %v548 = vadd.f32 0.0, %v547
  %v549 = vpop.f32.mrf.mxu0
  %v550 = vpop.f32.mrf.mxu0
  %v551 = vadd.f32 0.0, %v550
  %v552 = vpop.f32.mrf.mxu0
  %553 = vmatprep.mubr.bf16.mxu0 %v278
  %554 = vmatmul.mubr.bf16.gmra.mxu0 %v277
  %v555 = vpop.f32.mrf.mxu0
  %v556 = vadd.f32 0.0, %v555
  %v557 = vpop.f32.mrf.mxu0
  %v558 = vpop.f32.mrf.mxu0
  %v559 = vadd.f32 0.0, %v558
  %v560 = vpop.f32.mrf.mxu0
  %561 = vmatprep.mubr.bf16.mxu0 %v280
  %562 = vmatmul.mubr.bf16.gmra.mxu0 %v279
  %v563 = vpop.f32.mrf.mxu0
  %v564 = vadd.f32 0.0, %v563
  %v565 = vpop.f32.mrf.mxu0
  %v566 = vpop.f32.mrf.mxu0
  %v567 = vadd.f32 0.0, %v566
  %v568 = vpop.f32.mrf.mxu0
  %569 = vdwg.mxu0
  %v570 = vadd.f32 %v57, %v444
  %v571 = vadd.f32 %v58, %v447
  %v572 = vadd.f32 %v59, %v452
  %v573 = vadd.f32 %v60, %v455
  %v574 = vadd.f32 %v61, %v460
  %v575 = vadd.f32 %v62, %v463
  %v576 = vadd.f32 %v63, %v468
  %v577 = vadd.f32 %v64, %v471
  %v578 = vadd.f32 %v65, %v476
  %v579 = vadd.f32 %v66, %v479
  %v580 = vadd.f32 %v67, %v484
  %v581 = vadd.f32 %v68, %v487
  %v582 = vadd.f32 %v69, %v492
  %v583 = vadd.f32 %v70, %v495
  %v584 = vadd.f32 %v71, %v500
  %v585 = vadd.f32 %v72, %v503
  %v586 = vadd.f32 %v73, %v508
  %v587 = vadd.f32 %v74, %v511
  %v588 = vadd.f32 %v75, %v516
  %v589 = vadd.f32 %v76, %v519
  %v590 = vadd.f32 %v77, %v524
  %v591 = vadd.f32 %v78, %v527
  %v592 = vadd.f32 %v79, %v532
  %v593 = vadd.f32 %v80, %v535
  %v594 = vadd.f32 %v81, %v540
  %v595 = vadd.f32 %v82, %v543
  %v596 = vadd.f32 %v83, %v548
  %v597 = vadd.f32 %v84, %v551
  %v598 = vadd.f32 %v85, %v556
  %v599 = vadd.f32 %v86, %v559
  %v600 = vadd.f32 %v87, %v564
  %v601 = vadd.f32 %v88, %v567
  %602 = vst [vmem:[#allocation2] sm:$0xff] %v570
  %603 = vst [vmem:[#allocation2 + $0x8] sm:$0xff] %v571
  %604 = vst [vmem:[#allocation2 + $0x10] sm:$0xff] %v572
  %605 = vst [vmem:[#allocation2 + $0x18] sm:$0xff] %v573
  %606 = vst [vmem:[#allocation2 + $0x20] sm:$0xff] %v574
  %607 = vst [vmem:[#allocation2 + $0x28] sm:$0xff] %v575
  %608 = vst [vmem:[#allocation2 + $0x30] sm:$0xff] %v576
  %609 = vst [vmem:[#allocation2 + $0x38] sm:$0xff] %v577
  %610 = vst [vmem:[#allocation2 + $0x40] sm:$0xff] %v578
  %611 = vst [vmem:[#allocation2 + $0x48] sm:$0xff] %v579
  %612 = vst [vmem:[#allocation2 + $0x50] sm:$0xff] %v580
  %613 = vst [vmem:[#allocation2 + $0x58] sm:$0xff] %v581
  %614 = vst [vmem:[#allocation2 + $0x60] sm:$0xff] %v582
  %615 = vst [vmem:[#allocation2 + $0x68] sm:$0xff] %v583
  %616 = vst [vmem:[#allocation2 + $0x70] sm:$0xff] %v584
  %617 = vst [vmem:[#allocation2 + $0x78] sm:$0xff] %v585
  %618 = vst [vmem:[#allocation2 + $0x80] sm:$0xff] %v586
  %619 = vst [vmem:[#allocation2 + $0x88] sm:$0xff] %v587
  %620 = vst [vmem:[#allocation2 + $0x90] sm:$0xff] %v588
  %621 = vst [vmem:[#allocation2 + $0x98] sm:$0xff] %v589
  %622 = vst [vmem:[#allocation2 + $0xa0] sm:$0xff] %v590
  %623 = vst [vmem:[#allocation2 + $0xa8] sm:$0xff] %v591
  %624 = vst [vmem:[#allocation2 + $0xb0] sm:$0xff] %v592
  %625 = vst [vmem:[#allocation2 + $0xb8] sm:$0xff] %v593
  %626 = vst [vmem:[#allocation2 + $0xc0] sm:$0xff] %v594
  %627 = vst [vmem:[#allocation2 + $0xc8] sm:$0xff] %v595
  %628 = vst [vmem:[#allocation2 + $0xd0] sm:$0xff] %v596
  %629 = vst [vmem:[#allocation2 + $0xd8] sm:$0xff] %v597
  %630 = vst [vmem:[#allocation2 + $0xe0] sm:$0xff] %v598
  %631 = vst [vmem:[#allocation2 + $0xe8] sm:$0xff] %v599
  %632 = vst [vmem:[#allocation2 + $0xf0] sm:$0xff] %v600
  %633 = vst [vmem:[#allocation2 + $0xf8] sm:$0xff] %v601
  // Predicated region
  $region26: #{gcn_forward.4} parent=0 // pred_check
    %p634 = pneg %p21
  $region27: #{gcn_forward.4} parent=0 // pred_check_branch
    %636 = sbr.rel (%p634) target = $region29
  $region28: #{gcn_forward.4} parent=0 // pred_region
    %v637 = vld [vmem:[#allocation2] sm:$0xff]
    %v638 = vld [vmem:[#allocation2 + $0x8] sm:$0xff]
    %v639 = vld [vmem:[#allocation2 + $0x10] sm:$0xff]
    %v640 = vld [vmem:[#allocation2 + $0x18] sm:$0xff]
    %v641 = vld [vmem:[#allocation2 + $0x20] sm:$0xff]
    %v642 = vld [vmem:[#allocation2 + $0x28] sm:$0xff]
    %v643 = vld [vmem:[#allocation2 + $0x30] sm:$0xff]
    %v644 = vld [vmem:[#allocation2 + $0x38] sm:$0xff]
    %v645 = vld [vmem:[#allocation2 + $0x40] sm:$0xff]
    %v646 = vld [vmem:[#allocation2 + $0x48] sm:$0xff]
    %v647 = vld [vmem:[#allocation2 + $0x50] sm:$0xff]
    %v648 = vld [vmem:[#allocation2 + $0x58] sm:$0xff]
    %v649 = vld [vmem:[#allocation2 + $0x60] sm:$0xff]
    %v650 = vld [vmem:[#allocation2 + $0x68] sm:$0xff]
    %v651 = vld [vmem:[#allocation2 + $0x70] sm:$0xff]
    %v652 = vld [vmem:[#allocation2 + $0x78] sm:$0xff]
    %v653 = vld [vmem:[#allocation2 + $0x80] sm:$0xff]
    %v654 = vld [vmem:[#allocation2 + $0x88] sm:$0xff]
    %v655 = vld [vmem:[#allocation2 + $0x90] sm:$0xff]
    %v656 = vld [vmem:[#allocation2 + $0x98] sm:$0xff]
    %v657 = vld [vmem:[#allocation2 + $0xa0] sm:$0xff]
    %v658 = vld [vmem:[#allocation2 + $0xa8] sm:$0xff]
    %v659 = vld [vmem:[#allocation2 + $0xb0] sm:$0xff]
    %v660 = vld [vmem:[#allocation2 + $0xb8] sm:$0xff]
    %v661 = vld [vmem:[#allocation2 + $0xc0] sm:$0xff]
    %v662 = vld [vmem:[#allocation2 + $0xc8] sm:$0xff]
    %v663 = vld [vmem:[#allocation2 + $0xd0] sm:$0xff]
    %v664 = vld [vmem:[#allocation2 + $0xd8] sm:$0xff]
    %v665 = vld [vmem:[#allocation2 + $0xe0] sm:$0xff]
    %v666 = vld [vmem:[#allocation2 + $0xe8] sm:$0xff]
    %v667 = vld [vmem:[#allocation2 + $0xf0] sm:$0xff]
    %v668 = vld [vmem:[#allocation2 + $0xf8] sm:$0xff]
    %v669 = vld [vmem:[%s2] sm:$0x1]
    %v671 = vlaneseq
    %v672 = vshrl.u32 %v671, 7
    %v673 = vsub.s32 0, %v672
    %v674 = vrot.slane %v669, %v673
    %v676 = vadd.f32 %v637, %v674
    %v677 = vadd.f32 %v638, %v674
    %v678 = vadd.f32 %v639, %v674
    %v679 = vadd.f32 %v640, %v674
    %v680 = vadd.f32 %v641, %v674
    %v681 = vadd.f32 %v642, %v674
    %v682 = vadd.f32 %v643, %v674
    %v683 = vadd.f32 %v644, %v674
    %v684 = vadd.f32 %v645, %v674
    %v685 = vadd.f32 %v646, %v674
    %v686 = vadd.f32 %v647, %v674
    %v687 = vadd.f32 %v648, %v674
    %v688 = vadd.f32 %v649, %v674
    %v689 = vadd.f32 %v650, %v674
    %v690 = vadd.f32 %v651, %v674
    %v691 = vadd.f32 %v652, %v674
    %v692 = vadd.f32 %v653, %v674
    %v693 = vadd.f32 %v654, %v674
    %v694 = vadd.f32 %v655, %v674
    %v695 = vadd.f32 %v656, %v674
    %v696 = vadd.f32 %v657, %v674
    %v697 = vadd.f32 %v658, %v674
    %v698 = vadd.f32 %v659, %v674
    %v699 = vadd.f32 %v660, %v674
    %v700 = vadd.f32 %v661, %v674
    %v701 = vadd.f32 %v662, %v674
    %v702 = vadd.f32 %v663, %v674
    %v703 = vadd.f32 %v664, %v674
    %v704 = vadd.f32 %v665, %v674
    %v705 = vadd.f32 %v666, %v674
    %v706 = vadd.f32 %v667, %v674
    %v707 = vadd.f32 %v668, %v674
    %v708 = vpack.c.bf16 %v677, %v676
    %v709 = vpack.c.bf16 %v679, %v678
    %v710 = vpack.c.bf16 %v681, %v680
    %v711 = vpack.c.bf16 %v683, %v682
    %v712 = vpack.c.bf16 %v685, %v684
    %v713 = vpack.c.bf16 %v687, %v686
    %v714 = vpack.c.bf16 %v689, %v688
    %v715 = vpack.c.bf16 %v691, %v690
    %v716 = vpack.c.bf16 %v693, %v692
    %v717 = vpack.c.bf16 %v695, %v694
    %v718 = vpack.c.bf16 %v697, %v696
    %v719 = vpack.c.bf16 %v699, %v698
    %v720 = vpack.c.bf16 %v701, %v700
    %v721 = vpack.c.bf16 %v703, %v702
    %v722 = vpack.c.bf16 %v705, %v704
    %v723 = vpack.c.bf16 %v707, %v706
    %v724 = vld [vmem:[%s3] sm:$0xf]
    %v725 = vld [vmem:[%s3 + $0x4] sm:$0xf]
    %v726 = vld [vmem:[%s3 + $0x8] sm:$0xf]
    %v727 = vld [vmem:[%s3 + $0xc] sm:$0xf]
    %v728 = vld [vmem:[%s3 + $0x10] sm:$0xf]
    %v729 = vld [vmem:[%s3 + $0x14] sm:$0xf]
    %v730 = vld [vmem:[%s3 + $0x18] sm:$0xf]
    %v731 = vld [vmem:[%s3 + $0x1c] sm:$0xf]
    %v732 = vld [vmem:[%s3 + $0x20] sm:$0xf]
    %v733 = vld [vmem:[%s3 + $0x24] sm:$0xf]
    %v734 = vld [vmem:[%s3 + $0x28] sm:$0xf]
    %v735 = vld [vmem:[%s3 + $0x2c] sm:$0xf]
    %v736 = vld [vmem:[%s3 + $0x30] sm:$0xf]
    %v737 = vld [vmem:[%s3 + $0x34] sm:$0xf]
    %v738 = vld [vmem:[%s3 + $0x38] sm:$0xf]
    %v739 = vld [vmem:[%s3 + $0x3c] sm:$0xf]
    %v740 = vld [vmem:[%s4] sm:$0x1]
    %v742 = vlaneseq
    %v743 = vshrl.u32 %v742, 7
    %v744 = vsub.s32 0, %v743
    %v745 = vrot.slane %v740, %v744
    %v763 = vunpack.c.l.b16 %v724
    %v764 = vunpack.c.l.b16 %v725
    %v765 = vunpack.c.l.b16 %v726
    %v766 = vunpack.c.l.b16 %v727
    %v767 = vunpack.c.l.b16 %v728
    %v768 = vunpack.c.l.b16 %v729
    %v769 = vunpack.c.l.b16 %v730
    %v770 = vunpack.c.l.b16 %v731
    %v771 = vunpack.c.l.b16 %v732
    %v772 = vunpack.c.l.b16 %v733
    %v773 = vunpack.c.l.b16 %v734
    %v774 = vunpack.c.l.b16 %v735
    %v775 = vunpack.c.l.b16 %v736
    %v776 = vunpack.c.l.b16 %v737
    %v777 = vunpack.c.l.b16 %v738
    %v778 = vunpack.c.l.b16 %v739
    %v779 = vpack.c.b16 %v764, %v763
    %v780 = vpack.c.b16 %v766, %v765
    %v781 = vpack.c.b16 %v768, %v767
    %v782 = vpack.c.b16 %v770, %v769
    %v783 = vpack.c.b16 %v772, %v771
    %v784 = vpack.c.b16 %v774, %v773
    %v785 = vpack.c.b16 %v776, %v775
    %v786 = vpack.c.b16 %v778, %v777
    %795 = vmatprep.subr.bf16.mxu0 0
    %796 = vmatpush1.bf16.msra.mxu0 %v786
    %797 = vmatprep.subr.bf16.mxu0 0
    %798 = vmatpush1.bf16.msra.mxu0 %v785
    %799 = vmatprep.subr.bf16.mxu0 0
    %800 = vmatpush1.bf16.msra.mxu0 %v784
    %801 = vmatprep.subr.bf16.mxu0 0
    %802 = vmatpush1.bf16.msra.mxu0 %v783
    %803 = vmatprep.subr.bf16.mxu0 0
    %804 = vmatpush1.bf16.msra.mxu0 %v782
    %805 = vmatprep.subr.bf16.mxu0 0
    %806 = vmatpush1.bf16.msra.mxu0 %v781
    %807 = vmatprep.subr.bf16.mxu0 0
    %808 = vmatpush1.bf16.msra.mxu0 %v780
    %809 = vmatprep.subr.bf16.mxu0 0
    %810 = vmatpush1.bf16.msra.mxu0 %v779
    %811 = vmatprep.subr.bf16.mxu0 0
    %812 = vmatpush2.bf16.msra.mxu0 0
    %813 = vmatprep.subr.bf16.mxu0 0
    %814 = vmatpush2.bf16.msra.mxu0 0
    %815 = vmatprep.subr.bf16.mxu0 0
    %816 = vmatpush2.bf16.msra.mxu0 0
    %817 = vmatprep.subr.bf16.mxu0 0
    %818 = vmatpush2.bf16.msra.mxu0 0
    %819 = vmatprep.subr.bf16.mxu0 0
    %820 = vmatpush2.bf16.msra.mxu0 0
    %821 = vmatprep.subr.bf16.mxu0 0
    %822 = vmatpush2.bf16.msra.mxu0 0
    %823 = vmatprep.subr.bf16.mxu0 0
    %824 = vmatpush2.bf16.msra.mxu0 0
    %825 = vmatprep.subr.bf16.mxu0 0
    %826 = vmatpush2.bf16.msra.mxu0 0
    %827 = vmatprep.mubr.bf16.mxu0 0
    %828 = vmatmul.mubr.bf16.gmra.mxu0 %v708
    %v829 = vpop.f32.mrf.mxu0
    %v830 = vadd.f32 %v745, %v829
    %v831 = vpop.f32.mrf.mxu0
    %v832 = vpop.f32.mrf.mxu0
    %v833 = vadd.f32 %v745, %v832
    %v834 = vpop.f32.mrf.mxu0
    %835 = vmatprep.mubr.bf16.mxu0 0
    %836 = vmatmul.mubr.bf16.gmra.mxu0 %v709
    %v837 = vpop.f32.mrf.mxu0
    %v838 = vadd.f32 %v745, %v837
    %v839 = vpop.f32.mrf.mxu0
    %v840 = vpop.f32.mrf.mxu0
    %v841 = vadd.f32 %v745, %v840
    %v842 = vpop.f32.mrf.mxu0
    %843 = vmatprep.mubr.bf16.mxu0 0
    %844 = vmatmul.mubr.bf16.gmra.mxu0 %v710
    %v845 = vpop.f32.mrf.mxu0
    %v846 = vadd.f32 %v745, %v845
    %v847 = vpop.f32.mrf.mxu0
    %v848 = vpop.f32.mrf.mxu0
    %v849 = vadd.f32 %v745, %v848
    %v850 = vpop.f32.mrf.mxu0
    %851 = vmatprep.mubr.bf16.mxu0 0
    %852 = vmatmul.mubr.bf16.gmra.mxu0 %v711
    %v853 = vpop.f32.mrf.mxu0
    %v854 = vadd.f32 %v745, %v853
    %v855 = vpop.f32.mrf.mxu0
    %v856 = vpop.f32.mrf.mxu0
    %v857 = vadd.f32 %v745, %v856
    %v858 = vpop.f32.mrf.mxu0
    %859 = vmatprep.mubr.bf16.mxu0 0
    %860 = vmatmul.mubr.bf16.gmra.mxu0 %v712
    %v861 = vpop.f32.mrf.mxu0
    %v862 = vadd.f32 %v745, %v861
    %v863 = vpop.f32.mrf.mxu0
    %v864 = vpop.f32.mrf.mxu0
    %v865 = vadd.f32 %v745, %v864
    %v866 = vpop.f32.mrf.mxu0
    %867 = vmatprep.mubr.bf16.mxu0 0
    %868 = vmatmul.mubr.bf16.gmra.mxu0 %v713
    %v869 = vpop.f32.mrf.mxu0
    %v870 = vadd.f32 %v745, %v869
    %v871 = vpop.f32.mrf.mxu0
    %v872 = vpop.f32.mrf.mxu0
    %v873 = vadd.f32 %v745, %v872
    %v874 = vpop.f32.mrf.mxu0
    %875 = vmatprep.mubr.bf16.mxu0 0
    %876 = vmatmul.mubr.bf16.gmra.mxu0 %v714
    %v877 = vpop.f32.mrf.mxu0
    %v878 = vadd.f32 %v745, %v877
    %v879 = vpop.f32.mrf.mxu0
    %v880 = vpop.f32.mrf.mxu0
    %v881 = vadd.f32 %v745, %v880
    %v882 = vpop.f32.mrf.mxu0
    %883 = vmatprep.mubr.bf16.mxu0 0
    %884 = vmatmul.mubr.bf16.gmra.mxu0 %v715
    %v885 = vpop.f32.mrf.mxu0
    %v886 = vadd.f32 %v745, %v885
    %v887 = vpop.f32.mrf.mxu0
    %v888 = vpop.f32.mrf.mxu0
    %v889 = vadd.f32 %v745, %v888
    %v890 = vpop.f32.mrf.mxu0
    %891 = vmatprep.mubr.bf16.mxu0 0
    %892 = vmatmul.mubr.bf16.gmra.mxu0 %v716
    %v893 = vpop.f32.mrf.mxu0
    %v894 = vadd.f32 %v745, %v893
    %v895 = vpop.f32.mrf.mxu0
    %v896 = vpop.f32.mrf.mxu0
    %v897 = vadd.f32 %v745, %v896
    %v898 = vpop.f32.mrf.mxu0
    %899 = vmatprep.mubr.bf16.mxu0 0
    %900 = vmatmul.mubr.bf16.gmra.mxu0 %v717
    %v901 = vpop.f32.mrf.mxu0
    %v902 = vadd.f32 %v745, %v901
    %v903 = vpop.f32.mrf.mxu0
    %v904 = vpop.f32.mrf.mxu0
    %v905 = vadd.f32 %v745, %v904
    %v906 = vpop.f32.mrf.mxu0
    %907 = vmatprep.mubr.bf16.mxu0 0
    %908 = vmatmul.mubr.bf16.gmra.mxu0 %v718
    %v909 = vpop.f32.mrf.mxu0
    %v910 = vadd.f32 %v745, %v909
    %v911 = vpop.f32.mrf.mxu0
    %v912 = vpop.f32.mrf.mxu0
    %v913 = vadd.f32 %v745, %v912
    %v914 = vpop.f32.mrf.mxu0
    %915 = vmatprep.mubr.bf16.mxu0 0
    %916 = vmatmul.mubr.bf16.gmra.mxu0 %v719
    %v917 = vpop.f32.mrf.mxu0
    %v918 = vadd.f32 %v745, %v917
    %v919 = vpop.f32.mrf.mxu0
    %v920 = vpop.f32.mrf.mxu0
    %v921 = vadd.f32 %v745, %v920
    %v922 = vpop.f32.mrf.mxu0
    %923 = vmatprep.mubr.bf16.mxu0 0
    %924 = vmatmul.mubr.bf16.gmra.mxu0 %v720
    %v925 = vpop.f32.mrf.mxu0
    %v926 = vadd.f32 %v745, %v925
    %v927 = vpop.f32.mrf.mxu0
    %v928 = vpop.f32.mrf.mxu0
    %v929 = vadd.f32 %v745, %v928
    %v930 = vpop.f32.mrf.mxu0
    %931 = vmatprep.mubr.bf16.mxu0 0
    %932 = vmatmul.mubr.bf16.gmra.mxu0 %v721
    %v933 = vpop.f32.mrf.mxu0
    %v934 = vadd.f32 %v745, %v933
    %v935 = vpop.f32.mrf.mxu0
    %v936 = vpop.f32.mrf.mxu0
    %v937 = vadd.f32 %v745, %v936
    %v938 = vpop.f32.mrf.mxu0
    %939 = vmatprep.mubr.bf16.mxu0 0
    %940 = vmatmul.mubr.bf16.gmra.mxu0 %v722
    %v941 = vpop.f32.mrf.mxu0
    %v942 = vadd.f32 %v745, %v941
    %v943 = vpop.f32.mrf.mxu0
    %v944 = vpop.f32.mrf.mxu0
    %v945 = vadd.f32 %v745, %v944
    %v946 = vpop.f32.mrf.mxu0
    %947 = vmatprep.mubr.bf16.mxu0 0
    %948 = vmatmul.mubr.bf16.gmra.mxu0 %v723
    %v949 = vpop.f32.mrf.mxu0
    %v950 = vadd.f32 %v745, %v949
    %v951 = vpop.f32.mrf.mxu0
    %v952 = vpop.f32.mrf.mxu0
    %v953 = vadd.f32 %v745, %v952
    %v954 = vpop.f32.mrf.mxu0
    %955 = vdwg.mxu0
    %v956 = vpack.c.bf16 %v833, %v830
    %v957 = vpack.c.bf16 %v841, %v838
    %v958 = vpack.c.bf16 %v849, %v846
    %v959 = vpack.c.bf16 %v857, %v854
    %v960 = vpack.c.bf16 %v865, %v862
    %v961 = vpack.c.bf16 %v873, %v870
    %v962 = vpack.c.bf16 %v881, %v878
    %v963 = vpack.c.bf16 %v889, %v886
    %v964 = vpack.c.bf16 %v897, %v894
    %v965 = vpack.c.bf16 %v905, %v902
    %v966 = vpack.c.bf16 %v913, %v910
    %v967 = vpack.c.bf16 %v921, %v918
    %v968 = vpack.c.bf16 %v929, %v926
    %v969 = vpack.c.bf16 %v937, %v934
    %v970 = vpack.c.bf16 %v945, %v942
    %v971 = vpack.c.bf16 %v953, %v950
    %v988 = vunpack.c.l.b16 %v956
    %v989 = vunpack.c.h.b16 %v956
    %v990 = vunpack.c.l.b16 %v957
    %v991 = vunpack.c.h.b16 %v957
    %v992 = vunpack.c.l.b16 %v958
    %v993 = vunpack.c.h.b16 %v958
    %v994 = vunpack.c.l.b16 %v959
    %v995 = vunpack.c.h.b16 %v959
    %v996 = vunpack.c.l.b16 %v960
    %v997 = vunpack.c.h.b16 %v960
    %v998 = vunpack.c.l.b16 %v961
    %v999 = vunpack.c.h.b16 %v961
    %v1000 = vunpack.c.l.b16 %v962
    %v1001 = vunpack.c.h.b16 %v962
    %v1002 = vunpack.c.l.b16 %v963
    %v1003 = vunpack.c.h.b16 %v963
    %v1004 = vunpack.c.l.b16 %v964
    %v1005 = vunpack.c.h.b16 %v964
    %v1006 = vunpack.c.l.b16 %v965
    %v1007 = vunpack.c.h.b16 %v965
    %v1008 = vunpack.c.l.b16 %v966
    %v1009 = vunpack.c.h.b16 %v966
    %v1010 = vunpack.c.l.b16 %v967
    %v1011 = vunpack.c.h.b16 %v967
    %v1012 = vunpack.c.l.b16 %v968
    %v1013 = vunpack.c.h.b16 %v968
    %v1014 = vunpack.c.l.b16 %v969
    %v1015 = vunpack.c.h.b16 %v969
    %v1016 = vunpack.c.l.b16 %v970
    %v1017 = vunpack.c.h.b16 %v970
    %v1018 = vunpack.c.l.b16 %v971
    %v1019 = vunpack.c.h.b16 %v971
    %v1020 = vpack.c.b16 %v988, %v988
    %v1021 = vpack.c.b16 %v989, %v989
    %v1022 = vpack.c.b16 %v990, %v990
    %v1023 = vpack.c.b16 %v991, %v991
    %v1024 = vpack.c.b16 %v992, %v992
    %v1025 = vpack.c.b16 %v993, %v993
    %v1026 = vpack.c.b16 %v994, %v994
    %v1027 = vpack.c.b16 %v995, %v995
    %v1028 = vpack.c.b16 %v996, %v996
    %v1029 = vpack.c.b16 %v997, %v997
    %v1030 = vpack.c.b16 %v998, %v998
    %v1031 = vpack.c.b16 %v999, %v999
    %v1032 = vpack.c.b16 %v1000, %v1000
    %v1033 = vpack.c.b16 %v1001, %v1001
    %v1034 = vpack.c.b16 %v1002, %v1002
    %v1035 = vpack.c.b16 %v1003, %v1003
    %v1036 = vpack.c.b16 %v1004, %v1004
    %v1037 = vpack.c.b16 %v1005, %v1005
    %v1038 = vpack.c.b16 %v1006, %v1006
    %v1039 = vpack.c.b16 %v1007, %v1007
    %v1040 = vpack.c.b16 %v1008, %v1008
    %v1041 = vpack.c.b16 %v1009, %v1009
    %v1042 = vpack.c.b16 %v1010, %v1010
    %v1043 = vpack.c.b16 %v1011, %v1011
    %v1044 = vpack.c.b16 %v1012, %v1012
    %v1045 = vpack.c.b16 %v1013, %v1013
    %v1046 = vpack.c.b16 %v1014, %v1014
    %v1047 = vpack.c.b16 %v1015, %v1015
    %v1048 = vpack.c.b16 %v1016, %v1016
    %v1049 = vpack.c.b16 %v1017, %v1017
    %v1050 = vpack.c.b16 %v1018, %v1018
    %v1051 = vpack.c.b16 %v1019, %v1019
    %1084 = vst [vmem:[%s5] sm:$0xf] %v1020
    %1085 = vst [vmem:[%s5 + $0x4] sm:$0xf] %v1021
    %1086 = vst [vmem:[%s5 + $0x8] sm:$0xf] %v1022
    %1087 = vst [vmem:[%s5 + $0xc] sm:$0xf] %v1023
    %1088 = vst [vmem:[%s5 + $0x10] sm:$0xf] %v1024
    %1089 = vst [vmem:[%s5 + $0x14] sm:$0xf] %v1025
    %1090 = vst [vmem:[%s5 + $0x18] sm:$0xf] %v1026
    %1091 = vst [vmem:[%s5 + $0x1c] sm:$0xf] %v1027
    %1092 = vst [vmem:[%s5 + $0x20] sm:$0xf] %v1028
    %1093 = vst [vmem:[%s5 + $0x24] sm:$0xf] %v1029
    %1094 = vst [vmem:[%s5 + $0x28] sm:$0xf] %v1030
    %1095 = vst [vmem:[%s5 + $0x2c] sm:$0xf] %v1031
    %1096 = vst [vmem:[%s5 + $0x30] sm:$0xf] %v1032
    %1097 = vst [vmem:[%s5 + $0x34] sm:$0xf] %v1033
    %1098 = vst [vmem:[%s5 + $0x38] sm:$0xf] %v1034
    %1099 = vst [vmem:[%s5 + $0x3c] sm:$0xf] %v1035
    %1100 = vst [vmem:[%s5 + $0x40] sm:$0xf] %v1036
    %1101 = vst [vmem:[%s5 + $0x44] sm:$0xf] %v1037
    %1102 = vst [vmem:[%s5 + $0x48] sm:$0xf] %v1038
    %1103 = vst [vmem:[%s5 + $0x4c] sm:$0xf] %v1039
    %1104 = vst [vmem:[%s5 + $0x50] sm:$0xf] %v1040
    %1105 = vst [vmem:[%s5 + $0x54] sm:$0xf] %v1041
    %1106 = vst [vmem:[%s5 + $0x58] sm:$0xf] %v1042
    %1107 = vst [vmem:[%s5 + $0x5c] sm:$0xf] %v1043
    %1108 = vst [vmem:[%s5 + $0x60] sm:$0xf] %v1044
    %1109 = vst [vmem:[%s5 + $0x64] sm:$0xf] %v1045
    %1110 = vst [vmem:[%s5 + $0x68] sm:$0xf] %v1046
    %1111 = vst [vmem:[%s5 + $0x6c] sm:$0xf] %v1047
    %1112 = vst [vmem:[%s5 + $0x70] sm:$0xf] %v1048
    %1113 = vst [vmem:[%s5 + $0x74] sm:$0xf] %v1049
    %1114 = vst [vmem:[%s5 + $0x78] sm:$0xf] %v1050
    %1115 = vst [vmem:[%s5 + $0x7c] sm:$0xf] %v1051
  $region29: #{gcn_forward.4} parent=0 // pred_fallthru
    _
  // Predicated region
  $region30: #{gcn_forward.4} parent=0 // pred_check
    _
  $region31: #{gcn_forward.4} parent=0 // pred_check_branch
    %1117 = sbr.rel (0) target = $region33
  $region32: #{gcn_forward.4} parent=0 // pred_region
    _
  $region33: #{gcn_forward.4} parent=0 // pred_fallthru
    _
  // Predicated region
  $region34: #{gcn_forward.4} parent=0 // pred_check
    _
  $region35: #{gcn_forward.4} parent=0 // pred_check_branch
    %1119 = sbr.rel (0) target = $region37
  $region36: #{gcn_forward.4} parent=0 // pred_region
    _
  $region37: #{gcn_forward.4} parent=0 // pred_fallthru
    _

</llo_original>
